<compile_context>
chip_gen: v5e
topology: v5e:2x2
jax: 0.10.0
libtpu: 0.0.40
codegen_flags: <defaults>
</compile_context>

<pallas_src>
import math

import jax
import jax.numpy as jnp
from jax.experimental import pallas as pl
from jax.experimental.pallas import tpu as pltpu

# ----------------------------- configuration ------------------------------
VOCAB = 64
BATCH = 2
SEQ = 8
HIDDEN = 32
HEADS = 4
HEAD_DIM = HIDDEN // HEADS
MLP = 64
LAYERS = 2
EPS = 1e-5
DTYPE = jnp.float32
ROWS = BATCH * SEQ


# ------------------------------ kernel helpers ----------------------------
def _layer_norm(x, g, b):
    mu = jnp.mean(x, axis=-1, keepdims=True)
    var = jnp.mean((x - mu) ** 2, axis=-1, keepdims=True)
    return (x - mu) * jax.lax.rsqrt(var + EPS) * g + b


def _quick_gelu(x):
    # CLIP's activation: x * sigmoid(1.702 * x)
    return x * jax.nn.sigmoid(1.702 * x)


def _bf16(x):
    return x.astype(jnp.bfloat16)


# ------------------------------ fused Pallas kernel ------------------------
def fused_encoder_kernel(
    x_in_ref, mask_ref,
    ln1g_ref, ln1b_ref, wqkv_ref, bqkv_ref, wo_ref, bo_ref,
    ln2g_ref, ln2b_ref, w1_ref, b1_ref, w2_ref, b2_ref,
    fing_ref, finb_ref,
    hidden_ref, last_ref,
    attn_scr,
):
    x = x_in_ref[...].astype(jnp.float32)          # (ROWS, H) f32 activation
    mask = mask_ref[...]                           # (ROWS, ROWS) additive mask
                                                   # (causal + cross-batch block)

    # Static unroll over layers: weights are fully VMEM-resident (bf16), so no
    # streaming / grid is needed at this size.
    for l in range(LAYERS):
        # ---- self-attention block (pre-LN) ----
        h = _layer_norm(x, ln1g_ref[l], ln1b_ref[l])
        # Fused QKV projection: one bf16 MXU dot with f32 accumulation.
        qkv = jnp.dot(_bf16(h), wqkv_ref[l],
                      preferred_element_type=jnp.float32) + bqkv_ref[l]
        qkv = _bf16(qkv)                           # single cast; sliced per head

        # Heads statically unrolled; everything is 2-D (no batched matmuls).
        for hd in range(HEADS):
            q_h = qkv[:, 0 * HIDDEN + hd * HEAD_DIM:0 * HIDDEN + (hd + 1) * HEAD_DIM]
            k_h = qkv[:, 1 * HIDDEN + hd * HEAD_DIM:1 * HIDDEN + (hd + 1) * HEAD_DIM]
            v_h = qkv[:, 2 * HIDDEN + hd * HEAD_DIM:2 * HIDDEN + (hd + 1) * HEAD_DIM]

            # scores[i, j] = q_h[i, :] . k_h[j, :]  (scale pre-folded into Wq/bq)
            s = jax.lax.dot_general(
                q_h, k_h, (((1,), (1,)), ((), ())),
                preferred_element_type=jnp.float32)            # (ROWS, ROWS)
            s = s + mask
            s = s - jnp.max(s, axis=-1, keepdims=True)
            p = jnp.exp(s)
            p = p * pl.reciprocal(jnp.sum(p, axis=-1, keepdims=True), approx=True)

            o_h = jnp.dot(_bf16(p), v_h, preferred_element_type=jnp.float32)
            # Write head output directly at its lane offset (no concat).
            attn_scr[:, hd * HEAD_DIM:(hd + 1) * HEAD_DIM] = o_h

        attn = jnp.dot(_bf16(attn_scr[...]), wo_ref[l],
                       preferred_element_type=jnp.float32) + bo_ref[l]
        x = x + attn

        # ---- MLP block (pre-LN) ----
        h2 = _layer_norm(x, ln2g_ref[l], ln2b_ref[l])
        m = jnp.dot(_bf16(h2), w1_ref[l],
                    preferred_element_type=jnp.float32) + b1_ref[l]
        m = _quick_gelu(m)
        m = jnp.dot(_bf16(m), w2_ref[l],
                    preferred_element_type=jnp.float32) + b2_ref[l]
        x = x + m

        # Emit this layer's hidden state.
        hidden_ref[l] = x.astype(hidden_ref.dtype)

    # Final LayerNorm fused into the same invocation.
    last_ref[...] = _layer_norm(
        x, fing_ref[...], finb_ref[...]).astype(last_ref.dtype)


# ------------------------------ wrappers ----------------------------------
def pack_layer_params(layers):
    """Stack per-layer params along a leading layer axis; fuse QKV; fold scale;
    store matmul weights in bf16 (biases / LN params stay f32)."""
    scale = 1.0 / math.sqrt(HEAD_DIM)

    def stack(name, dtype=None):
        a = jnp.stack([lp[name] for lp in layers], axis=0)
        return a.astype(dtype) if dtype is not None else a

    wqkv = jnp.concatenate([stack("wq") * scale, stack("wk"), stack("wv")],
                           axis=-1)                           # (L, H, 3H)
    bqkv = jnp.concatenate([stack("bq") * scale, stack("bk"), stack("bv")],
                           axis=-1)                           # (L, 1, 3H)
    return {
        "ln1_g": stack("ln1_g"), "ln1_b": stack("ln1_b"),
        "wqkv": wqkv.astype(jnp.bfloat16), "bqkv": bqkv,
        "wo": stack("wo", jnp.bfloat16), "bo": stack("bo"),
        "ln2_g": stack("ln2_g"), "ln2_b": stack("ln2_b"),
        "w1": stack("w1", jnp.bfloat16), "b1": stack("b1"),
        "w2": stack("w2", jnp.bfloat16), "b2": stack("b2"),
    }


def run_fused_encoder(x_flat, mask, p, fin_g, fin_b):
    # Single un-gridded pallas_call: every input/output is one full VMEM block.
    out_shape = (
        jax.ShapeDtypeStruct((LAYERS, ROWS, HIDDEN), DTYPE),   # per-layer hidden
        jax.ShapeDtypeStruct((ROWS, HIDDEN), DTYPE),           # last hidden (post-LN)
    )
    return pl.pallas_call(
        fused_encoder_kernel,
        out_shape=out_shape,
        scratch_shapes=[pltpu.VMEM((ROWS, HIDDEN), jnp.float32)],  # attn scratch
    )(x_flat, mask,
      p["ln1_g"], p["ln1_b"], p["wqkv"], p["bqkv"], p["wo"], p["bo"],
      p["ln2_g"], p["ln2_b"], p["w1"], p["b1"], p["w2"], p["b2"],
      fin_g, fin_b)


def text_encoder_forward(input_ids, params):
    """Mirrors `text_encoder(input_ids, output_hidden_states=True)`."""
    # Embedding gather (glue, not the hot path).
    tok = jnp.take(params["token_emb"], input_ids, axis=0)        # (B, S, H)
    pos = params["pos_emb"][None, :, :]                           # (1, S, H)
    x = (tok + pos).astype(DTYPE)

    # Precompute one (ROWS, ROWS) additive mask combining causality and
    # cross-batch blocking for the flattened (B*S) attention.
    idx = jnp.arange(ROWS)
    b_idx = idx // SEQ
    s_idx = idx % SEQ
    allow = (b_idx[:, None] == b_idx[None, :]) & (s_idx[None, :] <= s_idx[:, None])
    mask = jnp.where(allow, 0.0, -1e9).astype(jnp.float32)        # (ROWS, ROWS)

    packed = pack_layer_params(params["layers"])
    hidden_stack, last_flat = run_fused_encoder(
        x.reshape(ROWS, HIDDEN), mask, packed,
        params["final_ln_g"], params["final_ln_b"])

    hidden_states = (x,) + tuple(
        hidden_stack[l].reshape(BATCH, SEQ, HIDDEN) for l in range(LAYERS))
    last_hidden_state = last_flat.reshape(BATCH, SEQ, HIDDEN)

    # CLIP-style pooling: hidden state at the position of the max id
    # (stand-in for the EOS token position).
    eos_pos = jnp.argmax(input_ids, axis=-1)
    pooler_output = last_hidden_state[jnp.arange(BATCH), eos_pos]

    return {
        "last_hidden_state": last_hidden_state,
        "pooler_output": pooler_output,
        "hidden_states": hidden_states,
    }


# --------------------------- parameter init --------------------------------
def init_params(key):
    def normal(key, shape, scale=0.02):
        return (scale * jax.random.normal(key, shape)).astype(DTYPE)

    keys = jax.random.split(key, 2 + LAYERS)
    params = {
        "token_emb": normal(keys[0], (VOCAB, HIDDEN)),
        "pos_emb": normal(keys[1], (SEQ, HIDDEN)),
        "final_ln_g": jnp.ones((1, HIDDEN), DTYPE),
        "final_ln_b": jnp.zeros((1, HIDDEN), DTYPE),
        "layers": [],
    }
    for li in range(LAYERS):
        lk = jax.random.split(keys[2 + li], 6)
        params["layers"].append({
            "ln1_g": jnp.ones((1, HIDDEN), DTYPE),
            "ln1_b": jnp.zeros((1, HIDDEN), DTYPE),
            "wq": normal(lk[0], (HIDDEN, HIDDEN)),
            "bq": jnp.zeros((1, HIDDEN), DTYPE),
            "wk": normal(lk[1], (HIDDEN, HIDDEN)),
            "bk": jnp.zeros((1, HIDDEN), DTYPE),
            "wv": normal(lk[2], (HIDDEN, HIDDEN)),
            "bv": jnp.zeros((1, HIDDEN), DTYPE),
            "wo": normal(lk[3], (HIDDEN, HIDDEN)),
            "bo": jnp.zeros((1, HIDDEN), DTYPE),
            "ln2_g": jnp.ones((1, HIDDEN), DTYPE),
            "ln2_b": jnp.zeros((1, HIDDEN), DTYPE),
            "w1": normal(lk[4], (HIDDEN, MLP)),
            "b1": jnp.zeros((1, MLP), DTYPE),
            "w2": normal(lk[5], (MLP, HIDDEN)),
            "b2": jnp.zeros((1, HIDDEN), DTYPE),
        })
    return params


# --------------------------------- main ------------------------------------
if __name__ == "__main__":
    key = jax.random.PRNGKey(0)
    k_ids, k_params = jax.random.split(key)
    input_ids = jax.random.randint(k_ids, (BATCH, SEQ), 0, VOCAB, dtype=jnp.int32)
    params = init_params(k_params)

    out = text_encoder_forward(input_ids, params)
    jax.block_until_ready(out)

    assert out["last_hidden_state"].shape == (BATCH, SEQ, HIDDEN)
    assert out["pooler_output"].shape == (BATCH, HIDDEN)
    assert len(out["hidden_states"]) == LAYERS + 1
    print("KERNEL_OK")
</pallas_src>

<mosaic_0001>
module attributes {stable_mosaic.version = 11 : i64} {
  func.func @fused_encoder_kernel(%arg0: memref<16x32xf32, #tpu.memory_space<vmem>>, %arg1: memref<16x16xf32, #tpu.memory_space<vmem>>, %arg2: memref<2x1x32xf32, #tpu.memory_space<vmem>>, %arg3: memref<2x1x32xf32, #tpu.memory_space<vmem>>, %arg4: memref<2x32x96xbf16, #tpu.memory_space<vmem>>, %arg5: memref<2x1x96xf32, #tpu.memory_space<vmem>>, %arg6: memref<2x32x32xbf16, #tpu.memory_space<vmem>>, %arg7: memref<2x1x32xf32, #tpu.memory_space<vmem>>, %arg8: memref<2x1x32xf32, #tpu.memory_space<vmem>>, %arg9: memref<2x1x32xf32, #tpu.memory_space<vmem>>, %arg10: memref<2x32x64xbf16, #tpu.memory_space<vmem>>, %arg11: memref<2x1x64xf32, #tpu.memory_space<vmem>>, %arg12: memref<2x64x32xbf16, #tpu.memory_space<vmem>>, %arg13: memref<2x1x32xf32, #tpu.memory_space<vmem>>, %arg14: memref<1x32xf32, #tpu.memory_space<vmem>>, %arg15: memref<1x32xf32, #tpu.memory_space<vmem>>, %arg16: memref<2x16x32xf32, #tpu.memory_space<vmem>>, %arg17: memref<16x32xf32, #tpu.memory_space<vmem>>, %arg18: memref<16x32xf32, #tpu.memory_space<vmem>>) attributes {dimension_semantics = [], scalar_prefetch = 0 : i64, scratch_operands = 1 : i64, tpu.core_type = #tpu.core_type<tc>} {
    %c0 = arith.constant 0 : index
    %c0_0 = arith.constant 0 : index
    %0 = vector.load %arg0[%c0, %c0_0] : memref<16x32xf32, #tpu.memory_space<vmem>>, vector<16x32xf32>
    %c0_1 = arith.constant 0 : index
    %c0_2 = arith.constant 0 : index
    %1 = vector.load %arg1[%c0_1, %c0_2] : memref<16x16xf32, #tpu.memory_space<vmem>>, vector<16x16xf32>
    %c0_3 = arith.constant 0 : index
    %c0_4 = arith.constant 0 : index
    %c0_5 = arith.constant 0 : index
    %2 = vector.load %arg2[%c0_3, %c0_4, %c0_5] : memref<2x1x32xf32, #tpu.memory_space<vmem>>, vector<1x1x32xf32>
    %3 = vector.shape_cast %2 : vector<1x1x32xf32> to vector<1x32xf32>
    %c0_6 = arith.constant 0 : index
    %c0_7 = arith.constant 0 : index
    %c0_8 = arith.constant 0 : index
    %4 = vector.load %arg3[%c0_6, %c0_7, %c0_8] : memref<2x1x32xf32, #tpu.memory_space<vmem>>, vector<1x1x32xf32>
    %5 = vector.shape_cast %4 : vector<1x1x32xf32> to vector<1x32xf32>
    %cst = arith.constant dense<0.000000e+00> : vector<16xf32>
    %6 = vector.multi_reduction <add>, %0, %cst [1] : vector<16x32xf32> to vector<16xf32>
    %7 = vector.shape_cast %6 : vector<16xf32> to vector<16x1xf32>
    %cst_9 = arith.constant 3.200000e+01 : f32
    %8 = vector.broadcast %cst_9 : f32 to vector<16x1xf32>
    %9 = arith.divf %7, %8 : vector<16x1xf32>
    %10 = vector.broadcast %9 : vector<16x1xf32> to vector<16x32xf32>
    %11 = arith.subf %0, %10 : vector<16x32xf32>
    %12 = arith.mulf %11, %11 : vector<16x32xf32>
    %cst_10 = arith.constant dense<0.000000e+00> : vector<16xf32>
    %13 = vector.multi_reduction <add>, %12, %cst_10 [1] : vector<16x32xf32> to vector<16xf32>
    %14 = vector.shape_cast %13 : vector<16xf32> to vector<16x1xf32>
    %cst_11 = arith.constant 3.200000e+01 : f32
    %15 = vector.broadcast %cst_11 : f32 to vector<16x1xf32>
    %16 = arith.divf %14, %15 : vector<16x1xf32>
    %17 = vector.broadcast %9 : vector<16x1xf32> to vector<16x32xf32>
    %18 = arith.subf %0, %17 : vector<16x32xf32>
    %cst_12 = arith.constant 9.99999974E-6 : f32
    %19 = vector.broadcast %cst_12 : f32 to vector<16x1xf32>
    %20 = arith.addf %16, %19 : vector<16x1xf32>
    %21 = math.rsqrt %20 : vector<16x1xf32>
    %22 = vector.broadcast %21 : vector<16x1xf32> to vector<16x32xf32>
    %23 = arith.mulf %18, %22 : vector<16x32xf32>
    %24 = vector.broadcast %3 : vector<1x32xf32> to vector<16x32xf32>
    %25 = arith.mulf %23, %24 : vector<16x32xf32>
    %26 = vector.broadcast %5 : vector<1x32xf32> to vector<16x32xf32>
    %27 = arith.addf %25, %26 : vector<16x32xf32>
    %28 = arith.truncf %27 : vector<16x32xf32> to vector<16x32xbf16>
    %c0_13 = arith.constant 0 : index
    %c0_14 = arith.constant 0 : index
    %c0_15 = arith.constant 0 : index
    %29 = vector.load %arg4[%c0_13, %c0_14, %c0_15] : memref<2x32x96xbf16, #tpu.memory_space<vmem>>, vector<1x32x96xbf16>
    %30 = vector.shape_cast %29 : vector<1x32x96xbf16> to vector<32x96xbf16>
    %cst_16 = arith.constant dense<0.000000e+00> : vector<16x96xf32>
    %31 = tpu.matmul %28, %30, %cst_16 {dimension_numbers = #tpu.dot_dimension_numbers<[1], [0], [0], [1], [0, 0, 1, 1], [], []>} : vector<16x32xbf16>, vector<32x96xbf16>, vector<16x96xf32> -> vector<16x96xf32>
    %c0_17 = arith.constant 0 : index
    %c0_18 = arith.constant 0 : index
    %c0_19 = arith.constant 0 : index
    %32 = vector.load %arg5[%c0_17, %c0_18, %c0_19] : memref<2x1x96xf32, #tpu.memory_space<vmem>>, vector<1x1x96xf32>
    %33 = vector.shape_cast %32 : vector<1x1x96xf32> to vector<1x96xf32>
    %34 = vector.broadcast %33 : vector<1x96xf32> to vector<16x96xf32>
    %35 = arith.addf %31, %34 : vector<16x96xf32>
    %36 = arith.truncf %35 : vector<16x96xf32> to vector<16x96xbf16>
    %37 = vector.extract_strided_slice %36 {offsets = [0, 0], sizes = [16, 8], strides = [1, 1]} : vector<16x96xbf16> to vector<16x8xbf16>
    %38 = vector.extract_strided_slice %36 {offsets = [0, 32], sizes = [16, 8], strides = [1, 1]} : vector<16x96xbf16> to vector<16x8xbf16>
    %39 = vector.extract_strided_slice %36 {offsets = [0, 64], sizes = [16, 8], strides = [1, 1]} : vector<16x96xbf16> to vector<16x8xbf16>
    %cst_20 = arith.constant dense<0.000000e+00> : vector<16x16xf32>
    %40 = tpu.matmul %37, %38, %cst_20 {dimension_numbers = #tpu.dot_dimension_numbers<[1], [1], [0], [0], [0, 0, 1, 0], [], []>} : vector<16x8xbf16>, vector<16x8xbf16>, vector<16x16xf32> -> vector<16x16xf32>
    %41 = arith.addf %40, %1 : vector<16x16xf32>
    %cst_21 = arith.constant dense<0xFF800000> : vector<16xf32>
    %42 = vector.multi_reduction <maximumf>, %41, %cst_21 [1] : vector<16x16xf32> to vector<16xf32>
    %43 = vector.shape_cast %42 : vector<16xf32> to vector<16x1xf32>
    %44 = vector.broadcast %43 : vector<16x1xf32> to vector<16x16xf32>
    %45 = arith.subf %41, %44 : vector<16x16xf32>
    %46 = math.exp %45 : vector<16x16xf32>
    %cst_22 = arith.constant dense<0.000000e+00> : vector<16xf32>
    %47 = vector.multi_reduction <add>, %46, %cst_22 [1] : vector<16x16xf32> to vector<16xf32>
    %48 = vector.shape_cast %47 : vector<16xf32> to vector<16x1xf32>
    %49 = tpu.reciprocal %48 {approx = true} : vector<16x1xf32> -> vector<16x1xf32>
    %50 = vector.broadcast %49 : vector<16x1xf32> to vector<16x16xf32>
    %51 = arith.mulf %46, %50 : vector<16x16xf32>
    %52 = arith.truncf %51 : vector<16x16xf32> to vector<16x16xbf16>
    %cst_23 = arith.constant dense<0.000000e+00> : vector<16x8xf32>
    %53 = tpu.matmul %52, %39, %cst_23 {dimension_numbers = #tpu.dot_dimension_numbers<[1], [0], [0], [1], [0, 0, 1, 1], [], []>} : vector<16x16xbf16>, vector<16x8xbf16>, vector<16x8xf32> -> vector<16x8xf32>
    %c0_24 = arith.constant 0 : index
    %c0_25 = arith.constant 0 : index
    %54 = vector.load %arg18[%c0_24, %c0_25] : memref<16x32xf32, #tpu.memory_space<vmem>>, vector<16x8xf32>
    tpu.vector_store %arg18[%c0_24, %c0_25], %53 {strides = array<i32>} : memref<16x32xf32, #tpu.memory_space<vmem>>, vector<16x8xf32>,
    %55 = vector.extract_strided_slice %36 {offsets = [0, 8], sizes = [16, 8], strides = [1, 1]} : vector<16x96xbf16> to vector<16x8xbf16>
    %56 = vector.extract_strided_slice %36 {offsets = [0, 40], sizes = [16, 8], strides = [1, 1]} : vector<16x96xbf16> to vector<16x8xbf16>
    %57 = vector.extract_strided_slice %36 {offsets = [0, 72], sizes = [16, 8], strides = [1, 1]} : vector<16x96xbf16> to vector<16x8xbf16>
    %cst_26 = arith.constant dense<0.000000e+00> : vector<16x16xf32>
    %58 = tpu.matmul %55, %56, %cst_26 {dimension_numbers = #tpu.dot_dimension_numbers<[1], [1], [0], [0], [0, 0, 1, 0], [], []>} : vector<16x8xbf16>, vector<16x8xbf16>, vector<16x16xf32> -> vector<16x16xf32>
    %59 = arith.addf %58, %1 : vector<16x16xf32>
    %cst_27 = arith.constant dense<0xFF800000> : vector<16xf32>
    %60 = vector.multi_reduction <maximumf>, %59, %cst_27 [1] : vector<16x16xf32> to vector<16xf32>
    %61 = vector.shape_cast %60 : vector<16xf32> to vector<16x1xf32>
    %62 = vector.broadcast %61 : vector<16x1xf32> to vector<16x16xf32>
    %63 = arith.subf %59, %62 : vector<16x16xf32>
    %64 = math.exp %63 : vector<16x16xf32>
    %cst_28 = arith.constant dense<0.000000e+00> : vector<16xf32>
    %65 = vector.multi_reduction <add>, %64, %cst_28 [1] : vector<16x16xf32> to vector<16xf32>
    %66 = vector.shape_cast %65 : vector<16xf32> to vector<16x1xf32>
    %67 = tpu.reciprocal %66 {approx = true} : vector<16x1xf32> -> vector<16x1xf32>
    %68 = vector.broadcast %67 : vector<16x1xf32> to vector<16x16xf32>
    %69 = arith.mulf %64, %68 : vector<16x16xf32>
    %70 = arith.truncf %69 : vector<16x16xf32> to vector<16x16xbf16>
    %cst_29 = arith.constant dense<0.000000e+00> : vector<16x8xf32>
    %71 = tpu.matmul %70, %57, %cst_29 {dimension_numbers = #tpu.dot_dimension_numbers<[1], [0], [0], [1], [0, 0, 1, 1], [], []>} : vector<16x16xbf16>, vector<16x8xbf16>, vector<16x8xf32> -> vector<16x8xf32>
    %c0_30 = arith.constant 0 : index
    %c8 = arith.constant 8 : index
    %72 = vector.load %arg18[%c0_30, %c8] : memref<16x32xf32, #tpu.memory_space<vmem>>, vector<16x8xf32>
    tpu.vector_store %arg18[%c0_30, %c8], %71 {strides = array<i32>} : memref<16x32xf32, #tpu.memory_space<vmem>>, vector<16x8xf32>,
    %73 = vector.extract_strided_slice %36 {offsets = [0, 16], sizes = [16, 8], strides = [1, 1]} : vector<16x96xbf16> to vector<16x8xbf16>
    %74 = vector.extract_strided_slice %36 {offsets = [0, 48], sizes = [16, 8], strides = [1, 1]} : vector<16x96xbf16> to vector<16x8xbf16>
    %75 = vector.extract_strided_slice %36 {offsets = [0, 80], sizes = [16, 8], strides = [1, 1]} : vector<16x96xbf16> to vector<16x8xbf16>
    %cst_31 = arith.constant dense<0.000000e+00> : vector<16x16xf32>
    %76 = tpu.matmul %73, %74, %cst_31 {dimension_numbers = #tpu.dot_dimension_numbers<[1], [1], [0], [0], [0, 0, 1, 0], [], []>} : vector<16x8xbf16>, vector<16x8xbf16>, vector<16x16xf32> -> vector<16x16xf32>
    %77 = arith.addf %76, %1 : vector<16x16xf32>
    %cst_32 = arith.constant dense<0xFF800000> : vector<16xf32>
    %78 = vector.multi_reduction <maximumf>, %77, %cst_32 [1] : vector<16x16xf32> to vector<16xf32>
    %79 = vector.shape_cast %78 : vector<16xf32> to vector<16x1xf32>
    %80 = vector.broadcast %79 : vector<16x1xf32> to vector<16x16xf32>
    %81 = arith.subf %77, %80 : vector<16x16xf32>
    %82 = math.exp %81 : vector<16x16xf32>
    %cst_33 = arith.constant dense<0.000000e+00> : vector<16xf32>
    %83 = vector.multi_reduction <add>, %82, %cst_33 [1] : vector<16x16xf32> to vector<16xf32>
    %84 = vector.shape_cast %83 : vector<16xf32> to vector<16x1xf32>
    %85 = tpu.reciprocal %84 {approx = true} : vector<16x1xf32> -> vector<16x1xf32>
    %86 = vector.broadcast %85 : vector<16x1xf32> to vector<16x16xf32>
    %87 = arith.mulf %82, %86 : vector<16x16xf32>
    %88 = arith.truncf %87 : vector<16x16xf32> to vector<16x16xbf16>
    %cst_34 = arith.constant dense<0.000000e+00> : vector<16x8xf32>
    %89 = tpu.matmul %88, %75, %cst_34 {dimension_numbers = #tpu.dot_dimension_numbers<[1], [0], [0], [1], [0, 0, 1, 1], [], []>} : vector<16x16xbf16>, vector<16x8xbf16>, vector<16x8xf32> -> vector<16x8xf32>
    %c0_35 = arith.constant 0 : index
    %c16 = arith.constant 16 : index
    %90 = vector.load %arg18[%c0_35, %c16] : memref<16x32xf32, #tpu.memory_space<vmem>>, vector<16x8xf32>
    tpu.vector_store %arg18[%c0_35, %c16], %89 {strides = array<i32>} : memref<16x32xf32, #tpu.memory_space<vmem>>, vector<16x8xf32>,
    %91 = vector.extract_strided_slice %36 {offsets = [0, 24], sizes = [16, 8], strides = [1, 1]} : vector<16x96xbf16> to vector<16x8xbf16>
    %92 = vector.extract_strided_slice %36 {offsets = [0, 56], sizes = [16, 8], strides = [1, 1]} : vector<16x96xbf16> to vector<16x8xbf16>
    %93 = vector.extract_strided_slice %36 {offsets = [0, 88], sizes = [16, 8], strides = [1, 1]} : vector<16x96xbf16> to vector<16x8xbf16>
    %cst_36 = arith.constant dense<0.000000e+00> : vector<16x16xf32>
    %94 = tpu.matmul %91, %92, %cst_36 {dimension_numbers = #tpu.dot_dimension_numbers<[1], [1], [0], [0], [0, 0, 1, 0], [], []>} : vector<16x8xbf16>, vector<16x8xbf16>, vector<16x16xf32> -> vector<16x16xf32>
    %95 = arith.addf %94, %1 : vector<16x16xf32>
    %cst_37 = arith.constant dense<0xFF800000> : vector<16xf32>
    %96 = vector.multi_reduction <maximumf>, %95, %cst_37 [1] : vector<16x16xf32> to vector<16xf32>
    %97 = vector.shape_cast %96 : vector<16xf32> to vector<16x1xf32>
    %98 = vector.broadcast %97 : vector<16x1xf32> to vector<16x16xf32>
    %99 = arith.subf %95, %98 : vector<16x16xf32>
    %100 = math.exp %99 : vector<16x16xf32>
    %cst_38 = arith.constant dense<0.000000e+00> : vector<16xf32>
    %101 = vector.multi_reduction <add>, %100, %cst_38 [1] : vector<16x16xf32> to vector<16xf32>
    %102 = vector.shape_cast %101 : vector<16xf32> to vector<16x1xf32>
    %103 = tpu.reciprocal %102 {approx = true} : vector<16x1xf32> -> vector<16x1xf32>
    %104 = vector.broadcast %103 : vector<16x1xf32> to vector<16x16xf32>
    %105 = arith.mulf %100, %104 : vector<16x16xf32>
    %106 = arith.truncf %105 : vector<16x16xf32> to vector<16x16xbf16>
    %cst_39 = arith.constant dense<0.000000e+00> : vector<16x8xf32>
    %107 = tpu.matmul %106, %93, %cst_39 {dimension_numbers = #tpu.dot_dimension_numbers<[1], [0], [0], [1], [0, 0, 1, 1], [], []>} : vector<16x16xbf16>, vector<16x8xbf16>, vector<16x8xf32> -> vector<16x8xf32>
    %c0_40 = arith.constant 0 : index
    %c24 = arith.constant 24 : index
    %108 = vector.load %arg18[%c0_40, %c24] : memref<16x32xf32, #tpu.memory_space<vmem>>, vector<16x8xf32>
    tpu.vector_store %arg18[%c0_40, %c24], %107 {strides = array<i32>} : memref<16x32xf32, #tpu.memory_space<vmem>>, vector<16x8xf32>,
    %c0_41 = arith.constant 0 : index
    %c0_42 = arith.constant 0 : index
    %109 = vector.load %arg18[%c0_41, %c0_42] : memref<16x32xf32, #tpu.memory_space<vmem>>, vector<16x32xf32>
    %110 = arith.truncf %109 : vector<16x32xf32> to vector<16x32xbf16>
    %c0_43 = arith.constant 0 : index
    %c0_44 = arith.constant 0 : index
    %c0_45 = arith.constant 0 : index
    %111 = vector.load %arg6[%c0_43, %c0_44, %c0_45] : memref<2x32x32xbf16, #tpu.memory_space<vmem>>, vector<1x32x32xbf16>
    %112 = vector.shape_cast %111 : vector<1x32x32xbf16> to vector<32x32xbf16>
    %cst_46 = arith.constant dense<0.000000e+00> : vector<16x32xf32>
    %113 = tpu.matmul %110, %112, %cst_46 {dimension_numbers = #tpu.dot_dimension_numbers<[1], [0], [0], [1], [0, 0, 1, 1], [], []>} : vector<16x32xbf16>, vector<32x32xbf16>, vector<16x32xf32> -> vector<16x32xf32>
    %c0_47 = arith.constant 0 : index
    %c0_48 = arith.constant 0 : index
    %c0_49 = arith.constant 0 : index
    %114 = vector.load %arg7[%c0_47, %c0_48, %c0_49] : memref<2x1x32xf32, #tpu.memory_space<vmem>>, vector<1x1x32xf32>
    %115 = vector.shape_cast %114 : vector<1x1x32xf32> to vector<1x32xf32>
    %116 = vector.broadcast %115 : vector<1x32xf32> to vector<16x32xf32>
    %117 = arith.addf %113, %116 : vector<16x32xf32>
    %118 = arith.addf %0, %117 : vector<16x32xf32>
    %c0_50 = arith.constant 0 : index
    %c0_51 = arith.constant 0 : index
    %c0_52 = arith.constant 0 : index
    %119 = vector.load %arg8[%c0_50, %c0_51, %c0_52] : memref<2x1x32xf32, #tpu.memory_space<vmem>>, vector<1x1x32xf32>
    %120 = vector.shape_cast %119 : vector<1x1x32xf32> to vector<1x32xf32>
    %c0_53 = arith.constant 0 : index
    %c0_54 = arith.constant 0 : index
    %c0_55 = arith.constant 0 : index
    %121 = vector.load %arg9[%c0_53, %c0_54, %c0_55] : memref<2x1x32xf32, #tpu.memory_space<vmem>>, vector<1x1x32xf32>
    %122 = vector.shape_cast %121 : vector<1x1x32xf32> to vector<1x32xf32>
    %cst_56 = arith.constant dense<0.000000e+00> : vector<16xf32>
    %123 = vector.multi_reduction <add>, %118, %cst_56 [1] : vector<16x32xf32> to vector<16xf32>
    %124 = vector.shape_cast %123 : vector<16xf32> to vector<16x1xf32>
    %cst_57 = arith.constant 3.200000e+01 : f32
    %125 = vector.broadcast %cst_57 : f32 to vector<16x1xf32>
    %126 = arith.divf %124, %125 : vector<16x1xf32>
    %127 = vector.broadcast %126 : vector<16x1xf32> to vector<16x32xf32>
    %128 = arith.subf %118, %127 : vector<16x32xf32>
    %129 = arith.mulf %128, %128 : vector<16x32xf32>
    %cst_58 = arith.constant dense<0.000000e+00> : vector<16xf32>
    %130 = vector.multi_reduction <add>, %129, %cst_58 [1] : vector<16x32xf32> to vector<16xf32>
    %131 = vector.shape_cast %130 : vector<16xf32> to vector<16x1xf32>
    %cst_59 = arith.constant 3.200000e+01 : f32
    %132 = vector.broadcast %cst_59 : f32 to vector<16x1xf32>
    %133 = arith.divf %131, %132 : vector<16x1xf32>
    %134 = vector.broadcast %126 : vector<16x1xf32> to vector<16x32xf32>
    %135 = arith.subf %118, %134 : vector<16x32xf32>
    %cst_60 = arith.constant 9.99999974E-6 : f32
    %136 = vector.broadcast %cst_60 : f32 to vector<16x1xf32>
    %137 = arith.addf %133, %136 : vector<16x1xf32>
    %138 = math.rsqrt %137 : vector<16x1xf32>
    %139 = vector.broadcast %138 : vector<16x1xf32> to vector<16x32xf32>
    %140 = arith.mulf %135, %139 : vector<16x32xf32>
    %141 = vector.broadcast %120 : vector<1x32xf32> to vector<16x32xf32>
    %142 = arith.mulf %140, %141 : vector<16x32xf32>
    %143 = vector.broadcast %122 : vector<1x32xf32> to vector<16x32xf32>
    %144 = arith.addf %142, %143 : vector<16x32xf32>
    %145 = arith.truncf %144 : vector<16x32xf32> to vector<16x32xbf16>
    %c0_61 = arith.constant 0 : index
    %c0_62 = arith.constant 0 : index
    %c0_63 = arith.constant 0 : index
    %146 = vector.load %arg10[%c0_61, %c0_62, %c0_63] : memref<2x32x64xbf16, #tpu.memory_space<vmem>>, vector<1x32x64xbf16>
    %147 = vector.shape_cast %146 : vector<1x32x64xbf16> to vector<32x64xbf16>
    %cst_64 = arith.constant dense<0.000000e+00> : vector<16x64xf32>
    %148 = tpu.matmul %145, %147, %cst_64 {dimension_numbers = #tpu.dot_dimension_numbers<[1], [0], [0], [1], [0, 0, 1, 1], [], []>} : vector<16x32xbf16>, vector<32x64xbf16>, vector<16x64xf32> -> vector<16x64xf32>
    %c0_65 = arith.constant 0 : index
    %c0_66 = arith.constant 0 : index
    %c0_67 = arith.constant 0 : index
    %149 = vector.load %arg11[%c0_65, %c0_66, %c0_67] : memref<2x1x64xf32, #tpu.memory_space<vmem>>, vector<1x1x64xf32>
    %150 = vector.shape_cast %149 : vector<1x1x64xf32> to vector<1x64xf32>
    %151 = vector.broadcast %150 : vector<1x64xf32> to vector<16x64xf32>
    %152 = arith.addf %148, %151 : vector<16x64xf32>
    %cst_68 = arith.constant 1.702000e+00 : f32
    %153 = vector.broadcast %cst_68 : f32 to vector<16x64xf32>
    %154 = arith.mulf %153, %152 : vector<16x64xf32>
    %155 = arith.negf %154 : vector<16x64xf32>
    %156 = math.exp %155 : vector<16x64xf32>
    %cst_69 = arith.constant 1.000000e+00 : f32
    %157 = vector.broadcast %cst_69 : f32 to vector<16x64xf32>
    %158 = arith.addf %157, %156 : vector<16x64xf32>
    %159 = arith.divf %157, %158 : vector<16x64xf32>
    %160 = arith.mulf %152, %159 : vector<16x64xf32>
    %161 = arith.truncf %160 : vector<16x64xf32> to vector<16x64xbf16>
    %c0_70 = arith.constant 0 : index
    %c0_71 = arith.constant 0 : index
    %c0_72 = arith.constant 0 : index
    %162 = vector.load %arg12[%c0_70, %c0_71, %c0_72] : memref<2x64x32xbf16, #tpu.memory_space<vmem>>, vector<1x64x32xbf16>
    %163 = vector.shape_cast %162 : vector<1x64x32xbf16> to vector<64x32xbf16>
    %cst_73 = arith.constant dense<0.000000e+00> : vector<16x32xf32>
    %164 = tpu.matmul %161, %163, %cst_73 {dimension_numbers = #tpu.dot_dimension_numbers<[1], [0], [0], [1], [0, 0, 1, 1], [], []>} : vector<16x64xbf16>, vector<64x32xbf16>, vector<16x32xf32> -> vector<16x32xf32>
    %c0_74 = arith.constant 0 : index
    %c0_75 = arith.constant 0 : index
    %c0_76 = arith.constant 0 : index
    %165 = vector.load %arg13[%c0_74, %c0_75, %c0_76] : memref<2x1x32xf32, #tpu.memory_space<vmem>>, vector<1x1x32xf32>
    %166 = vector.shape_cast %165 : vector<1x1x32xf32> to vector<1x32xf32>
    %167 = vector.broadcast %166 : vector<1x32xf32> to vector<16x32xf32>
    %168 = arith.addf %164, %167 : vector<16x32xf32>
    %169 = arith.addf %118, %168 : vector<16x32xf32>
    %c0_77 = arith.constant 0 : index
    %c0_78 = arith.constant 0 : index
    %c0_79 = arith.constant 0 : index
    %170 = vector.load %arg16[%c0_77, %c0_78, %c0_79] : memref<2x16x32xf32, #tpu.memory_space<vmem>>, vector<1x16x32xf32>
    %171 = vector.shape_cast %170 : vector<1x16x32xf32> to vector<16x32xf32>
    %172 = vector.shape_cast %169 : vector<16x32xf32> to vector<1x16x32xf32>
    tpu.vector_store %arg16[%c0_77, %c0_78, %c0_79], %172 {strides = array<i32>} : memref<2x16x32xf32, #tpu.memory_space<vmem>>, vector<1x16x32xf32>,
    %c1 = arith.constant 1 : index
    %c0_80 = arith.constant 0 : index
    %c0_81 = arith.constant 0 : index
    %173 = vector.load %arg2[%c1, %c0_80, %c0_81] : memref<2x1x32xf32, #tpu.memory_space<vmem>>, vector<1x1x32xf32>
    %174 = vector.shape_cast %173 : vector<1x1x32xf32> to vector<1x32xf32>
    %c1_82 = arith.constant 1 : index
    %c0_83 = arith.constant 0 : index
    %c0_84 = arith.constant 0 : index
    %175 = vector.load %arg3[%c1_82, %c0_83, %c0_84] : memref<2x1x32xf32, #tpu.memory_space<vmem>>, vector<1x1x32xf32>
    %176 = vector.shape_cast %175 : vector<1x1x32xf32> to vector<1x32xf32>
    %cst_85 = arith.constant dense<0.000000e+00> : vector<16xf32>
    %177 = vector.multi_reduction <add>, %169, %cst_85 [1] : vector<16x32xf32> to vector<16xf32>
    %178 = vector.shape_cast %177 : vector<16xf32> to vector<16x1xf32>
    %cst_86 = arith.constant 3.200000e+01 : f32
    %179 = vector.broadcast %cst_86 : f32 to vector<16x1xf32>
    %180 = arith.divf %178, %179 : vector<16x1xf32>
    %181 = vector.broadcast %180 : vector<16x1xf32> to vector<16x32xf32>
    %182 = arith.subf %169, %181 : vector<16x32xf32>
    %183 = arith.mulf %182, %182 : vector<16x32xf32>
    %cst_87 = arith.constant dense<0.000000e+00> : vector<16xf32>
    %184 = vector.multi_reduction <add>, %183, %cst_87 [1] : vector<16x32xf32> to vector<16xf32>
    %185 = vector.shape_cast %184 : vector<16xf32> to vector<16x1xf32>
    %cst_88 = arith.constant 3.200000e+01 : f32
    %186 = vector.broadcast %cst_88 : f32 to vector<16x1xf32>
    %187 = arith.divf %185, %186 : vector<16x1xf32>
    %188 = vector.broadcast %180 : vector<16x1xf32> to vector<16x32xf32>
    %189 = arith.subf %169, %188 : vector<16x32xf32>
    %cst_89 = arith.constant 9.99999974E-6 : f32
    %190 = vector.broadcast %cst_89 : f32 to vector<16x1xf32>
    %191 = arith.addf %187, %190 : vector<16x1xf32>
    %192 = math.rsqrt %191 : vector<16x1xf32>
    %193 = vector.broadcast %192 : vector<16x1xf32> to vector<16x32xf32>
    %194 = arith.mulf %189, %193 : vector<16x32xf32>
    %195 = vector.broadcast %174 : vector<1x32xf32> to vector<16x32xf32>
    %196 = arith.mulf %194, %195 : vector<16x32xf32>
    %197 = vector.broadcast %176 : vector<1x32xf32> to vector<16x32xf32>
    %198 = arith.addf %196, %197 : vector<16x32xf32>
    %199 = arith.truncf %198 : vector<16x32xf32> to vector<16x32xbf16>
    %c1_90 = arith.constant 1 : index
    %c0_91 = arith.constant 0 : index
    %c0_92 = arith.constant 0 : index
    %200 = vector.load %arg4[%c1_90, %c0_91, %c0_92] : memref<2x32x96xbf16, #tpu.memory_space<vmem>>, vector<1x32x96xbf16>
    %201 = vector.shape_cast %200 : vector<1x32x96xbf16> to vector<32x96xbf16>
    %cst_93 = arith.constant dense<0.000000e+00> : vector<16x96xf32>
    %202 = tpu.matmul %199, %201, %cst_93 {dimension_numbers = #tpu.dot_dimension_numbers<[1], [0], [0], [1], [0, 0, 1, 1], [], []>} : vector<16x32xbf16>, vector<32x96xbf16>, vector<16x96xf32> -> vector<16x96xf32>
    %c1_94 = arith.constant 1 : index
    %c0_95 = arith.constant 0 : index
    %c0_96 = arith.constant 0 : index
    %203 = vector.load %arg5[%c1_94, %c0_95, %c0_96] : memref<2x1x96xf32, #tpu.memory_space<vmem>>, vector<1x1x96xf32>
    %204 = vector.shape_cast %203 : vector<1x1x96xf32> to vector<1x96xf32>
    %205 = vector.broadcast %204 : vector<1x96xf32> to vector<16x96xf32>
    %206 = arith.addf %202, %205 : vector<16x96xf32>
    %207 = arith.truncf %206 : vector<16x96xf32> to vector<16x96xbf16>
    %208 = vector.extract_strided_slice %207 {offsets = [0, 0], sizes = [16, 8], strides = [1, 1]} : vector<16x96xbf16> to vector<16x8xbf16>
    %209 = vector.extract_strided_slice %207 {offsets = [0, 32], sizes = [16, 8], strides = [1, 1]} : vector<16x96xbf16> to vector<16x8xbf16>
    %210 = vector.extract_strided_slice %207 {offsets = [0, 64], sizes = [16, 8], strides = [1, 1]} : vector<16x96xbf16> to vector<16x8xbf16>
    %cst_97 = arith.constant dense<0.000000e+00> : vector<16x16xf32>
    %211 = tpu.matmul %208, %209, %cst_97 {dimension_numbers = #tpu.dot_dimension_numbers<[1], [1], [0], [0], [0, 0, 1, 0], [], []>} : vector<16x8xbf16>, vector<16x8xbf16>, vector<16x16xf32> -> vector<16x16xf32>
    %212 = arith.addf %211, %1 : vector<16x16xf32>
    %cst_98 = arith.constant dense<0xFF800000> : vector<16xf32>
    %213 = vector.multi_reduction <maximumf>, %212, %cst_98 [1] : vector<16x16xf32> to vector<16xf32>
    %214 = vector.shape_cast %213 : vector<16xf32> to vector<16x1xf32>
    %215 = vector.broadcast %214 : vector<16x1xf32> to vector<16x16xf32>
    %216 = arith.subf %212, %215 : vector<16x16xf32>
    %217 = math.exp %216 : vector<16x16xf32>
    %cst_99 = arith.constant dense<0.000000e+00> : vector<16xf32>
    %218 = vector.multi_reduction <add>, %217, %cst_99 [1] : vector<16x16xf32> to vector<16xf32>
    %219 = vector.shape_cast %218 : vector<16xf32> to vector<16x1xf32>
    %220 = tpu.reciprocal %219 {approx = true} : vector<16x1xf32> -> vector<16x1xf32>
    %221 = vector.broadcast %220 : vector<16x1xf32> to vector<16x16xf32>
    %222 = arith.mulf %217, %221 : vector<16x16xf32>
    %223 = arith.truncf %222 : vector<16x16xf32> to vector<16x16xbf16>
    %cst_100 = arith.constant dense<0.000000e+00> : vector<16x8xf32>
    %224 = tpu.matmul %223, %210, %cst_100 {dimension_numbers = #tpu.dot_dimension_numbers<[1], [0], [0], [1], [0, 0, 1, 1], [], []>} : vector<16x16xbf16>, vector<16x8xbf16>, vector<16x8xf32> -> vector<16x8xf32>
    %c0_101 = arith.constant 0 : index
    %c0_102 = arith.constant 0 : index
    %225 = vector.load %arg18[%c0_101, %c0_102] : memref<16x32xf32, #tpu.memory_space<vmem>>, vector<16x8xf32>
    tpu.vector_store %arg18[%c0_101, %c0_102], %224 {strides = array<i32>} : memref<16x32xf32, #tpu.memory_space<vmem>>, vector<16x8xf32>,
    %226 = vector.extract_strided_slice %207 {offsets = [0, 8], sizes = [16, 8], strides = [1, 1]} : vector<16x96xbf16> to vector<16x8xbf16>
    %227 = vector.extract_strided_slice %207 {offsets = [0, 40], sizes = [16, 8], strides = [1, 1]} : vector<16x96xbf16> to vector<16x8xbf16>
    %228 = vector.extract_strided_slice %207 {offsets = [0, 72], sizes = [16, 8], strides = [1, 1]} : vector<16x96xbf16> to vector<16x8xbf16>
    %cst_103 = arith.constant dense<0.000000e+00> : vector<16x16xf32>
    %229 = tpu.matmul %226, %227, %cst_103 {dimension_numbers = #tpu.dot_dimension_numbers<[1], [1], [0], [0], [0, 0, 1, 0], [], []>} : vector<16x8xbf16>, vector<16x8xbf16>, vector<16x16xf32> -> vector<16x16xf32>
    %230 = arith.addf %229, %1 : vector<16x16xf32>
    %cst_104 = arith.constant dense<0xFF800000> : vector<16xf32>
    %231 = vector.multi_reduction <maximumf>, %230, %cst_104 [1] : vector<16x16xf32> to vector<16xf32>
    %232 = vector.shape_cast %231 : vector<16xf32> to vector<16x1xf32>
    %233 = vector.broadcast %232 : vector<16x1xf32> to vector<16x16xf32>
    %234 = arith.subf %230, %233 : vector<16x16xf32>
    %235 = math.exp %234 : vector<16x16xf32>
    %cst_105 = arith.constant dense<0.000000e+00> : vector<16xf32>
    %236 = vector.multi_reduction <add>, %235, %cst_105 [1] : vector<16x16xf32> to vector<16xf32>
    %237 = vector.shape_cast %236 : vector<16xf32> to vector<16x1xf32>
    %238 = tpu.reciprocal %237 {approx = true} : vector<16x1xf32> -> vector<16x1xf32>
    %239 = vector.broadcast %238 : vector<16x1xf32> to vector<16x16xf32>
    %240 = arith.mulf %235, %239 : vector<16x16xf32>
    %241 = arith.truncf %240 : vector<16x16xf32> to vector<16x16xbf16>
    %cst_106 = arith.constant dense<0.000000e+00> : vector<16x8xf32>
    %242 = tpu.matmul %241, %228, %cst_106 {dimension_numbers = #tpu.dot_dimension_numbers<[1], [0], [0], [1], [0, 0, 1, 1], [], []>} : vector<16x16xbf16>, vector<16x8xbf16>, vector<16x8xf32> -> vector<16x8xf32>
    %c0_107 = arith.constant 0 : index
    %c8_108 = arith.constant 8 : index
    %243 = vector.load %arg18[%c0_107, %c8_108] : memref<16x32xf32, #tpu.memory_space<vmem>>, vector<16x8xf32>
    tpu.vector_store %arg18[%c0_107, %c8_108], %242 {strides = array<i32>} : memref<16x32xf32, #tpu.memory_space<vmem>>, vector<16x8xf32>,
    %244 = vector.extract_strided_slice %207 {offsets = [0, 16], sizes = [16, 8], strides = [1, 1]} : vector<16x96xbf16> to vector<16x8xbf16>
    %245 = vector.extract_strided_slice %207 {offsets = [0, 48], sizes = [16, 8], strides = [1, 1]} : vector<16x96xbf16> to vector<16x8xbf16>
    %246 = vector.extract_strided_slice %207 {offsets = [0, 80], sizes = [16, 8], strides = [1, 1]} : vector<16x96xbf16> to vector<16x8xbf16>
    %cst_109 = arith.constant dense<0.000000e+00> : vector<16x16xf32>
    %247 = tpu.matmul %244, %245, %cst_109 {dimension_numbers = #tpu.dot_dimension_numbers<[1], [1], [0], [0], [0, 0, 1, 0], [], []>} : vector<16x8xbf16>, vector<16x8xbf16>, vector<16x16xf32> -> vector<16x16xf32>
    %248 = arith.addf %247, %1 : vector<16x16xf32>
    %cst_110 = arith.constant dense<0xFF800000> : vector<16xf32>
    %249 = vector.multi_reduction <maximumf>, %248, %cst_110 [1] : vector<16x16xf32> to vector<16xf32>
    %250 = vector.shape_cast %249 : vector<16xf32> to vector<16x1xf32>
    %251 = vector.broadcast %250 : vector<16x1xf32> to vector<16x16xf32>
    %252 = arith.subf %248, %251 : vector<16x16xf32>
    %253 = math.exp %252 : vector<16x16xf32>
    %cst_111 = arith.constant dense<0.000000e+00> : vector<16xf32>
    %254 = vector.multi_reduction <add>, %253, %cst_111 [1] : vector<16x16xf32> to vector<16xf32>
    %255 = vector.shape_cast %254 : vector<16xf32> to vector<16x1xf32>
    %256 = tpu.reciprocal %255 {approx = true} : vector<16x1xf32> -> vector<16x1xf32>
    %257 = vector.broadcast %256 : vector<16x1xf32> to vector<16x16xf32>
    %258 = arith.mulf %253, %257 : vector<16x16xf32>
    %259 = arith.truncf %258 : vector<16x16xf32> to vector<16x16xbf16>
    %cst_112 = arith.constant dense<0.000000e+00> : vector<16x8xf32>
    %260 = tpu.matmul %259, %246, %cst_112 {dimension_numbers = #tpu.dot_dimension_numbers<[1], [0], [0], [1], [0, 0, 1, 1], [], []>} : vector<16x16xbf16>, vector<16x8xbf16>, vector<16x8xf32> -> vector<16x8xf32>
    %c0_113 = arith.constant 0 : index
    %c16_114 = arith.constant 16 : index
    %261 = vector.load %arg18[%c0_113, %c16_114] : memref<16x32xf32, #tpu.memory_space<vmem>>, vector<16x8xf32>
    tpu.vector_store %arg18[%c0_113, %c16_114], %260 {strides = array<i32>} : memref<16x32xf32, #tpu.memory_space<vmem>>, vector<16x8xf32>,
    %262 = vector.extract_strided_slice %207 {offsets = [0, 24], sizes = [16, 8], strides = [1, 1]} : vector<16x96xbf16> to vector<16x8xbf16>
    %263 = vector.extract_strided_slice %207 {offsets = [0, 56], sizes = [16, 8], strides = [1, 1]} : vector<16x96xbf16> to vector<16x8xbf16>
    %264 = vector.extract_strided_slice %207 {offsets = [0, 88], sizes = [16, 8], strides = [1, 1]} : vector<16x96xbf16> to vector<16x8xbf16>
    %cst_115 = arith.constant dense<0.000000e+00> : vector<16x16xf32>
    %265 = tpu.matmul %262, %263, %cst_115 {dimension_numbers = #tpu.dot_dimension_numbers<[1], [1], [0], [0], [0, 0, 1, 0], [], []>} : vector<16x8xbf16>, vector<16x8xbf16>, vector<16x16xf32> -> vector<16x16xf32>
    %266 = arith.addf %265, %1 : vector<16x16xf32>
    %cst_116 = arith.constant dense<0xFF800000> : vector<16xf32>
    %267 = vector.multi_reduction <maximumf>, %266, %cst_116 [1] : vector<16x16xf32> to vector<16xf32>
    %268 = vector.shape_cast %267 : vector<16xf32> to vector<16x1xf32>
    %269 = vector.broadcast %268 : vector<16x1xf32> to vector<16x16xf32>
    %270 = arith.subf %266, %269 : vector<16x16xf32>
    %271 = math.exp %270 : vector<16x16xf32>
    %cst_117 = arith.constant dense<0.000000e+00> : vector<16xf32>
    %272 = vector.multi_reduction <add>, %271, %cst_117 [1] : vector<16x16xf32> to vector<16xf32>
    %273 = vector.shape_cast %272 : vector<16xf32> to vector<16x1xf32>
    %274 = tpu.reciprocal %273 {approx = true} : vector<16x1xf32> -> vector<16x1xf32>
    %275 = vector.broadcast %274 : vector<16x1xf32> to vector<16x16xf32>
    %276 = arith.mulf %271, %275 : vector<16x16xf32>
    %277 = arith.truncf %276 : vector<16x16xf32> to vector<16x16xbf16>
    %cst_118 = arith.constant dense<0.000000e+00> : vector<16x8xf32>
    %278 = tpu.matmul %277, %264, %cst_118 {dimension_numbers = #tpu.dot_dimension_numbers<[1], [0], [0], [1], [0, 0, 1, 1], [], []>} : vector<16x16xbf16>, vector<16x8xbf16>, vector<16x8xf32> -> vector<16x8xf32>
    %c0_119 = arith.constant 0 : index
    %c24_120 = arith.constant 24 : index
    %279 = vector.load %arg18[%c0_119, %c24_120] : memref<16x32xf32, #tpu.memory_space<vmem>>, vector<16x8xf32>
    tpu.vector_store %arg18[%c0_119, %c24_120], %278 {strides = array<i32>} : memref<16x32xf32, #tpu.memory_space<vmem>>, vector<16x8xf32>,
    %c0_121 = arith.constant 0 : index
    %c0_122 = arith.constant 0 : index
    %280 = vector.load %arg18[%c0_121, %c0_122] : memref<16x32xf32, #tpu.memory_space<vmem>>, vector<16x32xf32>
    %281 = arith.truncf %280 : vector<16x32xf32> to vector<16x32xbf16>
    %c1_123 = arith.constant 1 : index
    %c0_124 = arith.constant 0 : index
    %c0_125 = arith.constant 0 : index
    %282 = vector.load %arg6[%c1_123, %c0_124, %c0_125] : memref<2x32x32xbf16, #tpu.memory_space<vmem>>, vector<1x32x32xbf16>
    %283 = vector.shape_cast %282 : vector<1x32x32xbf16> to vector<32x32xbf16>
    %cst_126 = arith.constant dense<0.000000e+00> : vector<16x32xf32>
    %284 = tpu.matmul %281, %283, %cst_126 {dimension_numbers = #tpu.dot_dimension_numbers<[1], [0], [0], [1], [0, 0, 1, 1], [], []>} : vector<16x32xbf16>, vector<32x32xbf16>, vector<16x32xf32> -> vector<16x32xf32>
    %c1_127 = arith.constant 1 : index
    %c0_128 = arith.constant 0 : index
    %c0_129 = arith.constant 0 : index
    %285 = vector.load %arg7[%c1_127, %c0_128, %c0_129] : memref<2x1x32xf32, #tpu.memory_space<vmem>>, vector<1x1x32xf32>
    %286 = vector.shape_cast %285 : vector<1x1x32xf32> to vector<1x32xf32>
    %287 = vector.broadcast %286 : vector<1x32xf32> to vector<16x32xf32>
    %288 = arith.addf %284, %287 : vector<16x32xf32>
    %289 = arith.addf %169, %288 : vector<16x32xf32>
    %c1_130 = arith.constant 1 : index
    %c0_131 = arith.constant 0 : index
    %c0_132 = arith.constant 0 : index
    %290 = vector.load %arg8[%c1_130, %c0_131, %c0_132] : memref<2x1x32xf32, #tpu.memory_space<vmem>>, vector<1x1x32xf32>
    %291 = vector.shape_cast %290 : vector<1x1x32xf32> to vector<1x32xf32>
    %c1_133 = arith.constant 1 : index
    %c0_134 = arith.constant 0 : index
    %c0_135 = arith.constant 0 : index
    %292 = vector.load %arg9[%c1_133, %c0_134, %c0_135] : memref<2x1x32xf32, #tpu.memory_space<vmem>>, vector<1x1x32xf32>
    %293 = vector.shape_cast %292 : vector<1x1x32xf32> to vector<1x32xf32>
    %cst_136 = arith.constant dense<0.000000e+00> : vector<16xf32>
    %294 = vector.multi_reduction <add>, %289, %cst_136 [1] : vector<16x32xf32> to vector<16xf32>
    %295 = vector.shape_cast %294 : vector<16xf32> to vector<16x1xf32>
    %cst_137 = arith.constant 3.200000e+01 : f32
    %296 = vector.broadcast %cst_137 : f32 to vector<16x1xf32>
    %297 = arith.divf %295, %296 : vector<16x1xf32>
    %298 = vector.broadcast %297 : vector<16x1xf32> to vector<16x32xf32>
    %299 = arith.subf %289, %298 : vector<16x32xf32>
    %300 = arith.mulf %299, %299 : vector<16x32xf32>
    %cst_138 = arith.constant dense<0.000000e+00> : vector<16xf32>
    %301 = vector.multi_reduction <add>, %300, %cst_138 [1] : vector<16x32xf32> to vector<16xf32>
    %302 = vector.shape_cast %301 : vector<16xf32> to vector<16x1xf32>
    %cst_139 = arith.constant 3.200000e+01 : f32
    %303 = vector.broadcast %cst_139 : f32 to vector<16x1xf32>
    %304 = arith.divf %302, %303 : vector<16x1xf32>
    %305 = vector.broadcast %297 : vector<16x1xf32> to vector<16x32xf32>
    %306 = arith.subf %289, %305 : vector<16x32xf32>
    %cst_140 = arith.constant 9.99999974E-6 : f32
    %307 = vector.broadcast %cst_140 : f32 to vector<16x1xf32>
    %308 = arith.addf %304, %307 : vector<16x1xf32>
    %309 = math.rsqrt %308 : vector<16x1xf32>
    %310 = vector.broadcast %309 : vector<16x1xf32> to vector<16x32xf32>
    %311 = arith.mulf %306, %310 : vector<16x32xf32>
    %312 = vector.broadcast %291 : vector<1x32xf32> to vector<16x32xf32>
    %313 = arith.mulf %311, %312 : vector<16x32xf32>
    %314 = vector.broadcast %293 : vector<1x32xf32> to vector<16x32xf32>
    %315 = arith.addf %313, %314 : vector<16x32xf32>
    %316 = arith.truncf %315 : vector<16x32xf32> to vector<16x32xbf16>
    %c1_141 = arith.constant 1 : index
    %c0_142 = arith.constant 0 : index
    %c0_143 = arith.constant 0 : index
    %317 = vector.load %arg10[%c1_141, %c0_142, %c0_143] : memref<2x32x64xbf16, #tpu.memory_space<vmem>>, vector<1x32x64xbf16>
    %318 = vector.shape_cast %317 : vector<1x32x64xbf16> to vector<32x64xbf16>
    %cst_144 = arith.constant dense<0.000000e+00> : vector<16x64xf32>
    %319 = tpu.matmul %316, %318, %cst_144 {dimension_numbers = #tpu.dot_dimension_numbers<[1], [0], [0], [1], [0, 0, 1, 1], [], []>} : vector<16x32xbf16>, vector<32x64xbf16>, vector<16x64xf32> -> vector<16x64xf32>
    %c1_145 = arith.constant 1 : index
    %c0_146 = arith.constant 0 : index
    %c0_147 = arith.constant 0 : index
    %320 = vector.load %arg11[%c1_145, %c0_146, %c0_147] : memref<2x1x64xf32, #tpu.memory_space<vmem>>, vector<1x1x64xf32>
    %321 = vector.shape_cast %320 : vector<1x1x64xf32> to vector<1x64xf32>
    %322 = vector.broadcast %321 : vector<1x64xf32> to vector<16x64xf32>
    %323 = arith.addf %319, %322 : vector<16x64xf32>
    %cst_148 = arith.constant 1.702000e+00 : f32
    %324 = vector.broadcast %cst_148 : f32 to vector<16x64xf32>
    %325 = arith.mulf %324, %323 : vector<16x64xf32>
    %326 = arith.negf %325 : vector<16x64xf32>
    %327 = math.exp %326 : vector<16x64xf32>
    %cst_149 = arith.constant 1.000000e+00 : f32
    %328 = vector.broadcast %cst_149 : f32 to vector<16x64xf32>
    %329 = arith.addf %328, %327 : vector<16x64xf32>
    %330 = arith.divf %328, %329 : vector<16x64xf32>
    %331 = arith.mulf %323, %330 : vector<16x64xf32>
    %332 = arith.truncf %331 : vector<16x64xf32> to vector<16x64xbf16>
    %c1_150 = arith.constant 1 : index
    %c0_151 = arith.constant 0 : index
    %c0_152 = arith.constant 0 : index
    %333 = vector.load %arg12[%c1_150, %c0_151, %c0_152] : memref<2x64x32xbf16, #tpu.memory_space<vmem>>, vector<1x64x32xbf16>
    %334 = vector.shape_cast %333 : vector<1x64x32xbf16> to vector<64x32xbf16>
    %cst_153 = arith.constant dense<0.000000e+00> : vector<16x32xf32>
    %335 = tpu.matmul %332, %334, %cst_153 {dimension_numbers = #tpu.dot_dimension_numbers<[1], [0], [0], [1], [0, 0, 1, 1], [], []>} : vector<16x64xbf16>, vector<64x32xbf16>, vector<16x32xf32> -> vector<16x32xf32>
    %c1_154 = arith.constant 1 : index
    %c0_155 = arith.constant 0 : index
    %c0_156 = arith.constant 0 : index
    %336 = vector.load %arg13[%c1_154, %c0_155, %c0_156] : memref<2x1x32xf32, #tpu.memory_space<vmem>>, vector<1x1x32xf32>
    %337 = vector.shape_cast %336 : vector<1x1x32xf32> to vector<1x32xf32>
    %338 = vector.broadcast %337 : vector<1x32xf32> to vector<16x32xf32>
    %339 = arith.addf %335, %338 : vector<16x32xf32>
    %340 = arith.addf %289, %339 : vector<16x32xf32>
    %c1_157 = arith.constant 1 : index
    %c0_158 = arith.constant 0 : index
    %c0_159 = arith.constant 0 : index
    %341 = vector.load %arg16[%c1_157, %c0_158, %c0_159] : memref<2x16x32xf32, #tpu.memory_space<vmem>>, vector<1x16x32xf32>
    %342 = vector.shape_cast %341 : vector<1x16x32xf32> to vector<16x32xf32>
    %343 = vector.shape_cast %340 : vector<16x32xf32> to vector<1x16x32xf32>
    tpu.vector_store %arg16[%c1_157, %c0_158, %c0_159], %343 {strides = array<i32>} : memref<2x16x32xf32, #tpu.memory_space<vmem>>, vector<1x16x32xf32>,
    %c0_160 = arith.constant 0 : index
    %c0_161 = arith.constant 0 : index
    %344 = vector.load %arg14[%c0_160, %c0_161] : memref<1x32xf32, #tpu.memory_space<vmem>>, vector<1x32xf32>
    %c0_162 = arith.constant 0 : index
    %c0_163 = arith.constant 0 : index
    %345 = vector.load %arg15[%c0_162, %c0_163] : memref<1x32xf32, #tpu.memory_space<vmem>>, vector<1x32xf32>
    %cst_164 = arith.constant dense<0.000000e+00> : vector<16xf32>
    %346 = vector.multi_reduction <add>, %340, %cst_164 [1] : vector<16x32xf32> to vector<16xf32>
    %347 = vector.shape_cast %346 : vector<16xf32> to vector<16x1xf32>
    %cst_165 = arith.constant 3.200000e+01 : f32
    %348 = vector.broadcast %cst_165 : f32 to vector<16x1xf32>
    %349 = arith.divf %347, %348 : vector<16x1xf32>
    %350 = vector.broadcast %349 : vector<16x1xf32> to vector<16x32xf32>
    %351 = arith.subf %340, %350 : vector<16x32xf32>
    %352 = arith.mulf %351, %351 : vector<16x32xf32>
    %cst_166 = arith.constant dense<0.000000e+00> : vector<16xf32>
    %353 = vector.multi_reduction <add>, %352, %cst_166 [1] : vector<16x32xf32> to vector<16xf32>
    %354 = vector.shape_cast %353 : vector<16xf32> to vector<16x1xf32>
    %cst_167 = arith.constant 3.200000e+01 : f32
    %355 = vector.broadcast %cst_167 : f32 to vector<16x1xf32>
    %356 = arith.divf %354, %355 : vector<16x1xf32>
    %357 = vector.broadcast %349 : vector<16x1xf32> to vector<16x32xf32>
    %358 = arith.subf %340, %357 : vector<16x32xf32>
    %cst_168 = arith.constant 9.99999974E-6 : f32
    %359 = vector.broadcast %cst_168 : f32 to vector<16x1xf32>
    %360 = arith.addf %356, %359 : vector<16x1xf32>
    %361 = math.rsqrt %360 : vector<16x1xf32>
    %362 = vector.broadcast %361 : vector<16x1xf32> to vector<16x32xf32>
    %363 = arith.mulf %358, %362 : vector<16x32xf32>
    %364 = vector.broadcast %344 : vector<1x32xf32> to vector<16x32xf32>
    %365 = arith.mulf %363, %364 : vector<16x32xf32>
    %366 = vector.broadcast %345 : vector<1x32xf32> to vector<16x32xf32>
    %367 = arith.addf %365, %366 : vector<16x32xf32>
    %c0_169 = arith.constant 0 : index
    %c0_170 = arith.constant 0 : index
    %368 = vector.load %arg17[%c0_169, %c0_170] : memref<16x32xf32, #tpu.memory_space<vmem>>, vector<16x32xf32>
    tpu.vector_store %arg17[%c0_169, %c0_170], %367 {strides = array<i32>} : memref<16x32xf32, #tpu.memory_space<vmem>>, vector<16x32xf32>,
    return
  }
}

</mosaic_0001>

<llo_original>
// kernel: tpu_custom_call.1
$region0: #{tpu_custom_call.1}
  #allocation0 [shape = 'u32[]', space=smem, size = 0x4, offset = 0x4, fixed_abs, tag = 'smem constant byte address 0x4 - core index']
  #allocation1 [shape = 'u32[72,128]{1,0:T(1,128)}', space=vmem, size = 0x9000, scoped, tag = 'internal scratch']
  #allocation2 [shape = 'f32[16,32]{1,0:T(8,128)}', space=vmem, size = 0x2000, scoped, tag = 'scratch operand']
  %s0 = inlined_call_operand.hbm [shape: f32[16,32], index: 0, kind: input, shape index: {}]
  %s1 = inlined_call_operand.hbm [shape: f32[16,16], index: 1, kind: input, shape index: {}]
  %s2 = inlined_call_operand.hbm [shape: f32[2,1,32], index: 2, kind: input, shape index: {}]
  %s3 = inlined_call_operand.hbm [shape: f32[2,1,32], index: 3, kind: input, shape index: {}]
  %s4 = inlined_call_operand.vmem [shape: bf16[2,32,96], index: 4, kind: input, shape index: {}]
  %s5 = inlined_call_operand.vmem [shape: f32[2,1,96], index: 5, kind: input, shape index: {}]
  %s6 = inlined_call_operand.vmem [shape: bf16[2,32,32], index: 6, kind: input, shape index: {}]
  %s7 = inlined_call_operand.vmem [shape: f32[2,1,32], index: 7, kind: input, shape index: {}]
  %s8 = inlined_call_operand.vmem [shape: f32[2,1,32], index: 8, kind: input, shape index: {}]
  %s9 = inlined_call_operand.hbm [shape: f32[2,1,32], index: 9, kind: input, shape index: {}]
  %s10 = inlined_call_operand.vmem [shape: bf16[2,32,64], index: 10, kind: input, shape index: {}]
  %s11 = inlined_call_operand.vmem [shape: f32[2,1,64], index: 11, kind: input, shape index: {}]
  %s12 = inlined_call_operand.vmem [shape: bf16[2,64,32], index: 12, kind: input, shape index: {}]
  %s13 = inlined_call_operand.vmem [shape: f32[2,1,32], index: 13, kind: input, shape index: {}]
  %s14 = inlined_call_operand.vmem [shape: f32[1,32], index: 14, kind: input, shape index: {}]
  %s15 = inlined_call_operand.vmem [shape: f32[1,32], index: 15, kind: input, shape index: {}]
  %s16 = inlined_call_operand.hbm [shape: f32[2,16,32], index: 16, kind: output, shape index: {0}]
  %s17 = inlined_call_operand.hbm [shape: f32[16,32], index: 17, kind: output, shape index: {1}]
  %18 = xla_tuple %s16, %s17
  %s19 = sld [smem:[#allocation0]]
  $region102: #{tpu_custom_call.1} parent=0
    _
  %s21 = ssub.s32 1, %s19
  %s22 = scalar_select 0, %s21, %s19
  $region1: #{tpu_custom_call.1} parent=0
    #allocation3 [shape = 'u8[8192]{0}', space=vmem, size = 0x2000, scoped, tag = 'input window, operand 0, single buffered']
    #allocation4 [shape = 's32[1]{0}', space=sflag, size = 0x4, scoped, tag = 'scoped memory for tpu_custom_call.1']
    #allocation5 [shape = 's32[1]{0}', space=sflag, size = 0x4, scoped, tag = 'scoped memory for tpu_custom_call.1']
    #allocation6 [shape = 'u8[8192]{0}', space=vmem, size = 0x2000, scoped, tag = 'input window, operand 1, single buffered']
    #allocation7 [shape = 's32[1]{0}', space=sflag, size = 0x4, scoped, tag = 'scoped memory for tpu_custom_call.1']
    #allocation8 [shape = 'u8[1024]{0}', space=vmem, size = 0x400, scoped, tag = 'input window, operand 2, single buffered']
    #allocation9 [shape = 'u8[1024]{0}', space=vmem, size = 0x400, scoped, tag = 'input window, operand 3, single buffered']
    #allocation10 [shape = 's32[1]{0}', space=sflag, size = 0x4, scoped, tag = 'scoped memory for tpu_custom_call.1']
    #allocation11 [shape = 'u8[1024]{0}', space=vmem, size = 0x400, scoped, tag = 'input window, operand 9, single buffered']
    #allocation12 [shape = 'u8[16384]{0}', space=vmem, size = 0x4000, scoped, tag = 'output window, operand 0, single buffered']
    #allocation13 [shape = 'u8[8192]{0}', space=vmem, size = 0x2000, scoped, tag = 'output window, operand 1, single buffered']
    #allocation14 [shape = 's32[1]{0}', space=sflag, size = 0x4, scoped, tag = 'scoped memory for tpu_custom_call.1']
    %23 = vsyncpa [#allocation4], 0
    %24 = vsyncpa [#allocation7], 0
    %25 = vsyncpa [#allocation10], 0
    %26 = vsyncpa [#allocation5], 0
    %27 = vsyncpa [#allocation14], 0
    // Predicated region
    $region2: #{tpu_custom_call.1} parent=1 // pred_check
      _
    $region3: #{tpu_custom_call.1} parent=1 // pred_check_branch
      %29 = sbr.rel (0) target = $region5
    $region4: #{tpu_custom_call.1} parent=1 // pred_region
      %31 = vsyncadd [#allocation4], 0
      %s32 = sshll.u32 %s0, 4
      %s33 = int_to_ptr.hbm [resolvable:$true] %s32
      %s34 = sshll.u32 [#allocation3], 4
      %s35 = int_to_ptr.vmem [resolvable:$true] %s34
      %40 = dma.hbm_to_vmem [thread:$0]  %s33, 256, %s35, [#allocation4], 128, 128, 8
    $region5: #{tpu_custom_call.1} parent=1 // pred_fallthru
      _
    // Predicated region
    $region6: #{tpu_custom_call.1} parent=1 // pred_check
      _
    $region7: #{tpu_custom_call.1} parent=1 // pred_check_branch
      %42 = sbr.rel (0) target = $region9
    $region8: #{tpu_custom_call.1} parent=1 // pred_region
      %44 = vsyncadd [#allocation7], 0
      %s45 = sshll.u32 %s1, 4
      %s46 = int_to_ptr.hbm [resolvable:$true] %s45
      %s47 = sshll.u32 [#allocation6], 4
      %s48 = int_to_ptr.vmem [resolvable:$true] %s47
      %53 = dma.hbm_to_vmem [thread:$0]  %s46, 256, %s48, [#allocation7], 128, 128, 8
    $region9: #{tpu_custom_call.1} parent=1 // pred_fallthru
      _
    // Predicated region
    $region10: #{tpu_custom_call.1} parent=1 // pred_check
      _
    $region11: #{tpu_custom_call.1} parent=1 // pred_check_branch
      %55 = sbr.rel (0) target = $region13
    $region12: #{tpu_custom_call.1} parent=1 // pred_region
      %57 = vsyncadd [#allocation7], 0
      %s58 = sshll.u32 %s2, 4
      %s59 = int_to_ptr.hbm [resolvable:$true] %s58
      %s60 = sshll.u32 [#allocation8], 4
      %s61 = int_to_ptr.vmem [resolvable:$true] %s60
      %66 = dma.hbm_to_vmem [thread:$0]  %s59, 32, %s61, [#allocation7], 16, 16, 1
    $region13: #{tpu_custom_call.1} parent=1 // pred_fallthru
      _
    // Predicated region
    $region14: #{tpu_custom_call.1} parent=1 // pred_check
      _
    $region15: #{tpu_custom_call.1} parent=1 // pred_check_branch
      %68 = sbr.rel (0) target = $region17
    $region16: #{tpu_custom_call.1} parent=1 // pred_region
      %70 = vsyncadd [#allocation10], 0
      %s71 = sshll.u32 %s3, 4
      %s72 = int_to_ptr.hbm [resolvable:$true] %s71
      %s73 = sshll.u32 [#allocation9], 4
      %s74 = int_to_ptr.vmem [resolvable:$true] %s73
      %79 = dma.hbm_to_vmem [thread:$0]  %s72, 32, %s74, [#allocation10], 16, 16, 1
    $region17: #{tpu_custom_call.1} parent=1 // pred_fallthru
      _
    // Predicated region
    $region18: #{tpu_custom_call.1} parent=1 // pred_check
      _
    $region19: #{tpu_custom_call.1} parent=1 // pred_check_branch
      %81 = sbr.rel (0) target = $region21
    $region20: #{tpu_custom_call.1} parent=1 // pred_region
      _
    $region21: #{tpu_custom_call.1} parent=1 // pred_fallthru
      _
    // Predicated region
    $region22: #{tpu_custom_call.1} parent=1 // pred_check
      _
    $region23: #{tpu_custom_call.1} parent=1 // pred_check_branch
      %83 = sbr.rel (0) target = $region25
    $region24: #{tpu_custom_call.1} parent=1 // pred_region
      _
    $region25: #{tpu_custom_call.1} parent=1 // pred_fallthru
      _
    // Predicated region
    $region26: #{tpu_custom_call.1} parent=1 // pred_check
      _
    $region27: #{tpu_custom_call.1} parent=1 // pred_check_branch
      %85 = sbr.rel (0) target = $region29
    $region28: #{tpu_custom_call.1} parent=1 // pred_region
      _
    $region29: #{tpu_custom_call.1} parent=1 // pred_fallthru
      _
    // Predicated region
    $region30: #{tpu_custom_call.1} parent=1 // pred_check
      _
    $region31: #{tpu_custom_call.1} parent=1 // pred_check_branch
      %87 = sbr.rel (0) target = $region33
    $region32: #{tpu_custom_call.1} parent=1 // pred_region
      _
    $region33: #{tpu_custom_call.1} parent=1 // pred_fallthru
      _
    // Predicated region
    $region34: #{tpu_custom_call.1} parent=1 // pred_check
      _
    $region35: #{tpu_custom_call.1} parent=1 // pred_check_branch
      %89 = sbr.rel (0) target = $region37
    $region36: #{tpu_custom_call.1} parent=1 // pred_region
      _
    $region37: #{tpu_custom_call.1} parent=1 // pred_fallthru
      _
    // Predicated region
    $region38: #{tpu_custom_call.1} parent=1 // pred_check
      _
    $region39: #{tpu_custom_call.1} parent=1 // pred_check_branch
      %91 = sbr.rel (0) target = $region41
    $region40: #{tpu_custom_call.1} parent=1 // pred_region
      %93 = vsyncadd [#allocation10], 0
      %s94 = sshll.u32 %s9, 4
      %s95 = int_to_ptr.hbm [resolvable:$true] %s94
      %s96 = sshll.u32 [#allocation11], 4
      %s97 = int_to_ptr.vmem [resolvable:$true] %s96
      %102 = dma.hbm_to_vmem [thread:$0]  %s95, 32, %s97, [#allocation10], 16, 16, 1
    $region41: #{tpu_custom_call.1} parent=1 // pred_fallthru
      _
    // Predicated region
    $region42: #{tpu_custom_call.1} parent=1 // pred_check
      _
    $region43: #{tpu_custom_call.1} parent=1 // pred_check_branch
      %104 = sbr.rel (0) target = $region45
    $region44: #{tpu_custom_call.1} parent=1 // pred_region
      _
    $region45: #{tpu_custom_call.1} parent=1 // pred_fallthru
      _
    // Predicated region
    $region46: #{tpu_custom_call.1} parent=1 // pred_check
      _
    $region47: #{tpu_custom_call.1} parent=1 // pred_check_branch
      %106 = sbr.rel (0) target = $region49
    $region48: #{tpu_custom_call.1} parent=1 // pred_region
      _
    $region49: #{tpu_custom_call.1} parent=1 // pred_fallthru
      _
    // Predicated region
    $region50: #{tpu_custom_call.1} parent=1 // pred_check
      _
    $region51: #{tpu_custom_call.1} parent=1 // pred_check_branch
      %108 = sbr.rel (0) target = $region53
    $region52: #{tpu_custom_call.1} parent=1 // pred_region
      _
    $region53: #{tpu_custom_call.1} parent=1 // pred_fallthru
      _
    // Predicated region
    $region54: #{tpu_custom_call.1} parent=1 // pred_check
      _
    $region55: #{tpu_custom_call.1} parent=1 // pred_check_branch
      %110 = sbr.rel (0) target = $region57
    $region56: #{tpu_custom_call.1} parent=1 // pred_region
      _
    $region57: #{tpu_custom_call.1} parent=1 // pred_fallthru
      _
    // Predicated region
    $region58: #{tpu_custom_call.1} parent=1 // pred_check
      _
    $region59: #{tpu_custom_call.1} parent=1 // pred_check_branch
      %112 = sbr.rel (0) target = $region61
    $region60: #{tpu_custom_call.1} parent=1 // pred_region
      _
    $region61: #{tpu_custom_call.1} parent=1 // pred_fallthru
      _
    // Predicated region
    $region62: #{tpu_custom_call.1} parent=1 // pred_check
      _
    $region63: #{tpu_custom_call.1} parent=1 // pred_check_branch
      %114 = sbr.rel (0) target = $region65
    $region64: #{tpu_custom_call.1} parent=1 // pred_region
      _
    $region65: #{tpu_custom_call.1} parent=1 // pred_fallthru
      _
    // Predicated region
    $region66: #{tpu_custom_call.1} parent=1 // pred_check
      _
    $region67: #{tpu_custom_call.1} parent=1 // pred_check_branch
      %116 = sbr.rel (0) target = $region69
    $region68: #{tpu_custom_call.1} parent=1 // pred_region
      %118 = dma.done [#allocation4], 256
    $region69: #{tpu_custom_call.1} parent=1 // pred_fallthru
      _
    // Predicated region
    $region70: #{tpu_custom_call.1} parent=1 // pred_check
      _
    $region71: #{tpu_custom_call.1} parent=1 // pred_check_branch
      %120 = sbr.rel (0) target = $region73
    $region72: #{tpu_custom_call.1} parent=1 // pred_region
      %122 = dma.done [#allocation7], 256
    $region73: #{tpu_custom_call.1} parent=1 // pred_fallthru
      _
    // Predicated region
    $region74: #{tpu_custom_call.1} parent=1 // pred_check
      _
    $region75: #{tpu_custom_call.1} parent=1 // pred_check_branch
      %124 = sbr.rel (0) target = $region77
    $region76: #{tpu_custom_call.1} parent=1 // pred_region
      %126 = dma.done [#allocation7], 32
    $region77: #{tpu_custom_call.1} parent=1 // pred_fallthru
      _
    // Predicated region
    $region78: #{tpu_custom_call.1} parent=1 // pred_check
      _
    $region79: #{tpu_custom_call.1} parent=1 // pred_check_branch
      %128 = sbr.rel (0) target = $region81
    $region80: #{tpu_custom_call.1} parent=1 // pred_region
      %130 = dma.done [#allocation10], 32
    $region81: #{tpu_custom_call.1} parent=1 // pred_fallthru
      _
    // Predicated region
    $region82: #{tpu_custom_call.1} parent=1 // pred_check
      _
    $region83: #{tpu_custom_call.1} parent=1 // pred_check_branch
      %132 = sbr.rel (0) target = $region85
    $region84: #{tpu_custom_call.1} parent=1 // pred_region
      %134 = dma.done [#allocation10], 32
    $region85: #{tpu_custom_call.1} parent=1 // pred_fallthru
      _
    %v136 = vld [vmem:[#allocation3] sm:$0xff]
    %v137 = vld [vmem:[#allocation3 + $0x8] sm:$0xff]
    %v138 = vld [vmem:[#allocation6] sm:$0xff]
    %v139 = vld [vmem:[#allocation6 + $0x8] sm:$0xff]
    %v140 = vld [vmem:[#allocation8] sm:$0x1]
    %v141 = vld [vmem:[#allocation9] sm:$0x1]
    %vm142 = vcmask 261120
    %v143 = vsel %vm142, %v136, 0.0
    %144 = vadd.xlane.f32.xlu0 %v143
    %v145 = vpop.xlane.xlu0 %144
    %v146 = vsel %vm142, %v137, 0.0
    %147 = vadd.xlane.f32.xlu0 %v146
    %v148 = vpop.xlane.xlu0 %147
    %v149 = vrcp.pop 32.0
    %v150 = vmul.f32 32.0, %v149
    %v151 = vsub.f32 1.0, %v150
    %v152 = vmul.f32 %v149, %v151
    %v153 = vadd.f32 %v149, %v152
    %vm154 = vweird.f32 %v149
    %v155 = vsel %vm154, %v149, %v153
    %v156 = vmul.f32 %v145, %v155
    %v157 = vmul.f32 %v148, %v155
    %v158 = vsub.f32 %v136, %v156
    %v159 = vsub.f32 %v137, %v157
    %v160 = vmul.f32 %v158, %v158
    %v161 = vmul.f32 %v159, %v159
    %v162 = vsel %vm142, %v160, 0.0
    %163 = vadd.xlane.f32.xlu0 %v162
    %v164 = vpop.xlane.xlu0 %163
    %v165 = vsel %vm142, %v161, 0.0
    %166 = vadd.xlane.f32.xlu0 %v165
    %v167 = vpop.xlane.xlu0 %166
    %v168 = vmul.f32 %v164, %v155
    %v169 = vmul.f32 %v167, %v155
    %v170 = vadd.f32 %v168, 1e-05
    %v171 = vadd.f32 %v169, 1e-05
    %v172 = vrsqrt.pop %v170
    %v173 = vmul.f32 %v172, %v170
    %v174 = vmul.f32 %v173, %v172
    %v175 = vmul.f32 0.5, %v174
    %v176 = vsub.f32 1.5, %v175
    %v177 = vmul.f32 %v172, %v176
    %vm178 = vweird.f32 %v170
    %vm179 = vweird.f32 %v172
    %vm180 = vmor %vm178, %vm179
    %v181 = vsel %vm180, %v172, %v177
    %v182 = vrsqrt.pop %v171
    %v183 = vmul.f32 %v182, %v171
    %v184 = vmul.f32 %v183, %v182
    %v185 = vmul.f32 0.5, %v184
    %v186 = vsub.f32 1.5, %v185
    %v187 = vmul.f32 %v182, %v186
    %vm188 = vweird.f32 %v171
    %vm189 = vweird.f32 %v182
    %vm190 = vmor %vm188, %vm189
    %v191 = vsel %vm190, %v182, %v187
    %v192 = vmul.f32 %v158, %v181
    %v193 = vmul.f32 %v159, %v191
    %v195 = vperm.slane %v140, 0
    %v197 = vmul.f32 %v192, %v195
    %v198 = vmul.f32 %v193, %v195
    %v200 = vperm.slane %v141, 0
    %v202 = vadd.f32 %v197, %v200
    %v203 = vadd.f32 %v198, %v200
    %v204 = vpack.c.bf16 %v203, %v202
    %v205 = vld [vmem:[%s4] sm:$0xf]
    %v206 = vld [vmem:[%s4 + $0x4] sm:$0xf]
    %v207 = vld [vmem:[%s4 + $0x8] sm:$0xf]
    %v208 = vld [vmem:[%s4 + $0xc] sm:$0xf]
    %v209 = vld [vmem:[%s5] sm:$0x1]
    %v211 = vperm.slane %v209, 0
    %v217 = vunpack.c.l.b16 %v205
    %v218 = vunpack.c.l.b16 %v206
    %v219 = vunpack.c.l.b16 %v207
    %v220 = vunpack.c.l.b16 %v208
    %v221 = vpack.c.b16 %v218, %v217
    %v222 = vpack.c.b16 %v220, %v219
    %v226 = vsel %vm142, %v204, 0
    %228 = vmatpush.bf16.msra.mxu0 0
    %229 = vmatpush.bf16.msra.mxu0 0
    %230 = vmatpush.bf16.msra.mxu0 0
    %231 = vmatpush.bf16.msra.mxu0 0
    %232 = vmatpush.bf16.msra.mxu0 0
    %233 = vmatpush.bf16.msra.mxu0 0
    %234 = vmatpush.bf16.msra.mxu0 %v222
    %235 = vmatpush.bf16.msra.mxu0 %v221
    %236 = vmatmul.bf16.gmra.mxu0 %v226
    %v237 = vpop.f32.mrf.mxu0
    %v238 = vadd.f32 %v211, %v237
    %v239 = vpop.f32.mrf.mxu0
    %v240 = vadd.f32 %v211, %v239
    %241 = vdwg.mxu0
    %v242 = vpack.c.bf16 %v238, %v238
    %v243 = vpack.c.bf16 %v240, %v240
    %v246 = vunpack.c.l.b16 %v242
    %v247 = vunpack.c.l.b16 %v243
    %v248 = vpack.c.b16 %v247, %v246
    %249 = vrot.lane.b32.xlu0 %v248, 96
    %v250 = vpop.permute.xlu0 %249
    %vm251 = vcmask 64512
    %v253 = vsel %vm251, %v248, 0
    %v256 = vsel %vm251, %v250, 0
    %258 = vmatpush.bf16.xpose.msra.mxu0 0
    %259 = vmatpush.bf16.xpose.msra.mxu0 0
    %260 = vmatpush.bf16.xpose.msra.mxu0 0
    %261 = vmatpush.bf16.xpose.msra.mxu0 0
    %262 = vmatpush.bf16.xpose.msra.mxu0 0
    %263 = vmatpush.bf16.xpose.msra.mxu0 0
    %264 = vmatpush.bf16.xpose.msra.mxu0 0
    %265 = vmatpush.bf16.xpose.msra.mxu0 %v256
    %266 = vmatmul.bf16.gmra.mxu0 %v253
    %v267 = vpop.f32.mrf.mxu0
    %v268 = vadd.f32 %v138, %v267
    %v269 = vpop.f32.mrf.mxu0
    %v270 = vadd.f32 %v139, %v269
    %271 = vdwg.mxu0
    %vm272 = vcmask 130048
    %v273 = vsel %vm272, %v268, -inf
    %274 = vmax.xlane.f32.xlu0 %v273
    %v275 = vpop.xlane.xlu0 %274
    %v276 = vsel %vm272, %v270, -inf
    %277 = vmax.xlane.f32.xlu0 %v276
    %v278 = vpop.xlane.xlu0 %277
    %v279 = vsub.f32 %v268, %v275
    %v280 = vsub.f32 %v270, %v278
    %v281 = vmul.f32 %v279, 1.442695
    %v282 = vpow.pop %v281
    %v283 = vmul.f32 %v280, 1.442695
    %v284 = vpow.pop %v283
    %v285 = vsel %vm272, %v282, 0.0
    %286 = vadd.xlane.f32.xlu0 %v285
    %v287 = vpop.xlane.xlu0 %286
    %v288 = vsel %vm272, %v284, 0.0
    %289 = vadd.xlane.f32.xlu0 %v288
    %v290 = vpop.xlane.xlu0 %289
    %v291 = vrcp.pop %v287
    %v292 = vrcp.pop %v290
    %v293 = vmul.f32 %v282, %v291
    %v294 = vmul.f32 %v284, %v292
    %v295 = vpack.c.bf16 %v294, %v293
    %296 = vrot.lane.b32.xlu0 %v248, 64
    %v297 = vpop.permute.xlu0 %296
    %v300 = vsel %vm272, %v295, 0
    %302 = vmatpush.bf16.msra.mxu0 0
    %303 = vmatpush.bf16.msra.mxu0 0
    %304 = vmatpush.bf16.msra.mxu0 0
    %305 = vmatpush.bf16.msra.mxu0 0
    %306 = vmatpush.bf16.msra.mxu0 0
    %307 = vmatpush.bf16.msra.mxu0 0
    %308 = vmatpush.bf16.msra.mxu0 0
    %309 = vmatpush.bf16.msra.mxu0 %v297
    %310 = vmatmul.bf16.gmra.mxu0 %v300
    %v311 = vpop.f32.mrf.mxu0
    %v312 = vadd.f32 0.0, %v311
    %v313 = vpop.f32.mrf.mxu0
    %v314 = vadd.f32 0.0, %v313
    %315 = vdwg.mxu0
    %316 = vst.msk [vmem:[#allocation2] sm:$0xff] %vm251, %v312
    %317 = vst.msk [vmem:[#allocation2 + $0x8] sm:$0xff] %vm251, %v314
    %318 = vrot.lane.b32.xlu0 %v248, 120
    %v319 = vpop.permute.xlu0 %318
    %320 = vrot.lane.b32.xlu0 %v248, 88
    %v321 = vpop.permute.xlu0 %320
    %v323 = vsel %vm251, %v319, 0
    %v326 = vsel %vm251, %v321, 0
    %328 = vmatpush.bf16.xpose.msra.mxu0 0
    %329 = vmatpush.bf16.xpose.msra.mxu0 0
    %330 = vmatpush.bf16.xpose.msra.mxu0 0
    %331 = vmatpush.bf16.xpose.msra.mxu0 0
    %332 = vmatpush.bf16.xpose.msra.mxu0 0
    %333 = vmatpush.bf16.xpose.msra.mxu0 0
    %334 = vmatpush.bf16.xpose.msra.mxu0 0
    %335 = vmatpush.bf16.xpose.msra.mxu0 %v326
    %336 = vmatmul.bf16.gmra.mxu0 %v323
    %v337 = vpop.f32.mrf.mxu0
    %v338 = vadd.f32 %v138, %v337
    %v339 = vpop.f32.mrf.mxu0
    %v340 = vadd.f32 %v139, %v339
    %341 = vdwg.mxu0
    %v342 = vsel %vm272, %v338, -inf
    %343 = vmax.xlane.f32.xlu0 %v342
    %v344 = vpop.xlane.xlu0 %343
    %v345 = vsel %vm272, %v340, -inf
    %346 = vmax.xlane.f32.xlu0 %v345
    %v347 = vpop.xlane.xlu0 %346
    %v348 = vsub.f32 %v338, %v344
    %v349 = vsub.f32 %v340, %v347
    %v350 = vmul.f32 %v348, 1.442695
    %v351 = vpow.pop %v350
    %v352 = vmul.f32 %v349, 1.442695
    %v353 = vpow.pop %v352
    %v354 = vsel %vm272, %v351, 0.0
    %355 = vadd.xlane.f32.xlu0 %v354
    %v356 = vpop.xlane.xlu0 %355
    %v357 = vsel %vm272, %v353, 0.0
    %358 = vadd.xlane.f32.xlu0 %v357
    %v359 = vpop.xlane.xlu0 %358
    %v360 = vrcp.pop %v356
    %v361 = vrcp.pop %v359
    %v362 = vmul.f32 %v351, %v360
    %v363 = vmul.f32 %v353, %v361
    %v364 = vpack.c.bf16 %v363, %v362
    %365 = vrot.lane.b32.xlu0 %v248, 56
    %v366 = vpop.permute.xlu0 %365
    %v369 = vsel %vm272, %v364, 0
    %371 = vmatpush.bf16.msra.mxu0 0
    %372 = vmatpush.bf16.msra.mxu0 0
    %373 = vmatpush.bf16.msra.mxu0 0
    %374 = vmatpush.bf16.msra.mxu0 0
    %375 = vmatpush.bf16.msra.mxu0 0
    %376 = vmatpush.bf16.msra.mxu0 0
    %377 = vmatpush.bf16.msra.mxu0 0
    %378 = vmatpush.bf16.msra.mxu0 %v366
    %379 = vmatmul.bf16.gmra.mxu0 %v369
    %v380 = vpop.f32.mrf.mxu0
    %v381 = vadd.f32 0.0, %v380
    %v382 = vpop.f32.mrf.mxu0
    %v383 = vadd.f32 0.0, %v382
    %384 = vdwg.mxu0
    %387 = vrot.lane.b32.xlu0 %v381, 8
    %v388 = vpop.permute.xlu0 %387
    %389 = vrot.lane.b32.xlu0 %v383, 8
    %v390 = vpop.permute.xlu0 %389
    %vm393 = vcmask 130112
    %394 = vst.msk [vmem:[#allocation2] sm:$0xff] %vm393, %v388
    %395 = vst.msk [vmem:[#allocation2 + $0x8] sm:$0xff] %vm393, %v390
    %396 = vrot.lane.b32.xlu0 %v248, 112
    %v397 = vpop.permute.xlu0 %396
    %398 = vrot.lane.b32.xlu0 %v248, 80
    %v399 = vpop.permute.xlu0 %398
    %v401 = vsel %vm251, %v397, 0
    %v404 = vsel %vm251, %v399, 0
    %406 = vmatpush.bf16.xpose.msra.mxu0 0
    %407 = vmatpush.bf16.xpose.msra.mxu0 0
    %408 = vmatpush.bf16.xpose.msra.mxu0 0
    %409 = vmatpush.bf16.xpose.msra.mxu0 0
    %410 = vmatpush.bf16.xpose.msra.mxu0 0
    %411 = vmatpush.bf16.xpose.msra.mxu0 0
    %412 = vmatpush.bf16.xpose.msra.mxu0 0
    %413 = vmatpush.bf16.xpose.msra.mxu0 %v404
    %414 = vmatmul.bf16.gmra.mxu0 %v401
    %v415 = vpop.f32.mrf.mxu0
    %v416 = vadd.f32 %v138, %v415
    %v417 = vpop.f32.mrf.mxu0
    %v418 = vadd.f32 %v139, %v417
    %419 = vdwg.mxu0
    %v420 = vsel %vm272, %v416, -inf
    %421 = vmax.xlane.f32.xlu0 %v420
    %v422 = vpop.xlane.xlu0 %421
    %v423 = vsel %vm272, %v418, -inf
    %424 = vmax.xlane.f32.xlu0 %v423
    %v425 = vpop.xlane.xlu0 %424
    %v426 = vsub.f32 %v416, %v422
    %v427 = vsub.f32 %v418, %v425
    %v428 = vmul.f32 %v426, 1.442695
    %v429 = vpow.pop %v428
    %v430 = vmul.f32 %v427, 1.442695
    %v431 = vpow.pop %v430
    %v432 = vsel %vm272, %v429, 0.0
    %433 = vadd.xlane.f32.xlu0 %v432
    %v434 = vpop.xlane.xlu0 %433
    %v435 = vsel %vm272, %v431, 0.0
    %436 = vadd.xlane.f32.xlu0 %v435
    %v437 = vpop.xlane.xlu0 %436
    %v438 = vrcp.pop %v434
    %v439 = vrcp.pop %v437
    %v440 = vmul.f32 %v429, %v438
    %v441 = vmul.f32 %v431, %v439
    %v442 = vpack.c.bf16 %v441, %v440
    %443 = vrot.lane.b32.xlu0 %v248, 48
    %v444 = vpop.permute.xlu0 %443
    %v447 = vsel %vm272, %v442, 0
    %449 = vmatpush.bf16.msra.mxu0 0
    %450 = vmatpush.bf16.msra.mxu0 0
    %451 = vmatpush.bf16.msra.mxu0 0
    %452 = vmatpush.bf16.msra.mxu0 0
    %453 = vmatpush.bf16.msra.mxu0 0
    %454 = vmatpush.bf16.msra.mxu0 0
    %455 = vmatpush.bf16.msra.mxu0 0
    %456 = vmatpush.bf16.msra.mxu0 %v444
    %457 = vmatmul.bf16.gmra.mxu0 %v447
    %v458 = vpop.f32.mrf.mxu0
    %v459 = vadd.f32 0.0, %v458
    %v460 = vpop.f32.mrf.mxu0
    %v461 = vadd.f32 0.0, %v460
    %462 = vdwg.mxu0
    %465 = vrot.lane.b32.xlu0 %v459, 16
    %v466 = vpop.permute.xlu0 %465
    %467 = vrot.lane.b32.xlu0 %v461, 16
    %v468 = vpop.permute.xlu0 %467
    %vm471 = vcmask 195712
    %472 = vst.msk [vmem:[#allocation2] sm:$0xff] %vm471, %v466
    %473 = vst.msk [vmem:[#allocation2 + $0x8] sm:$0xff] %vm471, %v468
    %474 = vrot.lane.b32.xlu0 %v248, 104
    %v475 = vpop.permute.xlu0 %474
    %476 = vrot.lane.b32.xlu0 %v248, 72
    %v477 = vpop.permute.xlu0 %476
    %v479 = vsel %vm251, %v475, 0
    %v482 = vsel %vm251, %v477, 0
    %484 = vmatpush.bf16.xpose.msra.mxu0 0
    %485 = vmatpush.bf16.xpose.msra.mxu0 0
    %486 = vmatpush.bf16.xpose.msra.mxu0 0
    %487 = vmatpush.bf16.xpose.msra.mxu0 0
    %488 = vmatpush.bf16.xpose.msra.mxu0 0
    %489 = vmatpush.bf16.xpose.msra.mxu0 0
    %490 = vmatpush.bf16.xpose.msra.mxu0 0
    %491 = vmatpush.bf16.xpose.msra.mxu0 %v482
    %492 = vmatmul.bf16.gmra.mxu0 %v479
    %v493 = vpop.f32.mrf.mxu0
    %v494 = vadd.f32 %v138, %v493
    %v495 = vpop.f32.mrf.mxu0
    %v496 = vadd.f32 %v139, %v495
    %497 = vdwg.mxu0
    %v498 = vsel %vm272, %v494, -inf
    %499 = vmax.xlane.f32.xlu0 %v498
    %v500 = vpop.xlane.xlu0 %499
    %v501 = vsel %vm272, %v496, -inf
    %502 = vmax.xlane.f32.xlu0 %v501
    %v503 = vpop.xlane.xlu0 %502
    %v504 = vsub.f32 %v494, %v500
    %v505 = vsub.f32 %v496, %v503
    %v506 = vmul.f32 %v504, 1.442695
    %v507 = vpow.pop %v506
    %v508 = vmul.f32 %v505, 1.442695
    %v509 = vpow.pop %v508
    %v510 = vsel %vm272, %v507, 0.0
    %511 = vadd.xlane.f32.xlu0 %v510
    %v512 = vpop.xlane.xlu0 %511
    %v513 = vsel %vm272, %v509, 0.0
    %514 = vadd.xlane.f32.xlu0 %v513
    %v515 = vpop.xlane.xlu0 %514
    %v516 = vrcp.pop %v512
    %v517 = vrcp.pop %v515
    %v518 = vmul.f32 %v507, %v516
    %v519 = vmul.f32 %v509, %v517
    %v520 = vpack.c.bf16 %v519, %v518
    %521 = vrot.lane.b32.xlu0 %v248, 40
    %v522 = vpop.permute.xlu0 %521
    %v525 = vsel %vm272, %v520, 0
    %527 = vmatpush.bf16.msra.mxu0 0
    %528 = vmatpush.bf16.msra.mxu0 0
    %529 = vmatpush.bf16.msra.mxu0 0
    %530 = vmatpush.bf16.msra.mxu0 0
    %531 = vmatpush.bf16.msra.mxu0 0
    %532 = vmatpush.bf16.msra.mxu0 0
    %533 = vmatpush.bf16.msra.mxu0 0
    %534 = vmatpush.bf16.msra.mxu0 %v522
    %535 = vmatmul.bf16.gmra.mxu0 %v525
    %v536 = vpop.f32.mrf.mxu0
    %v537 = vadd.f32 0.0, %v536
    %v538 = vpop.f32.mrf.mxu0
    %v539 = vadd.f32 0.0, %v538
    %540 = vdwg.mxu0
    %543 = vrot.lane.b32.xlu0 %v537, 24
    %v544 = vpop.permute.xlu0 %543
    %545 = vrot.lane.b32.xlu0 %v539, 24
    %v546 = vpop.permute.xlu0 %545
    %vm549 = vcmask 261312
    %550 = vst.msk [vmem:[#allocation2] sm:$0xff] %vm549, %v544
    %551 = vst.msk [vmem:[#allocation2 + $0x8] sm:$0xff] %vm549, %v546
    %v552 = vld [vmem:[#allocation2] sm:$0xff]
    %v553 = vld [vmem:[#allocation2 + $0x8] sm:$0xff]
    %v554 = vpack.c.bf16 %v553, %v552
    %v555 = vld [vmem:[%s6] sm:$0xf]
    %v556 = vld [vmem:[%s6 + $0x4] sm:$0xf]
    %v557 = vld [vmem:[%s6 + $0x8] sm:$0xf]
    %v558 = vld [vmem:[%s6 + $0xc] sm:$0xf]
    %v559 = vld [vmem:[%s7] sm:$0x1]
    %v561 = vperm.slane %v559, 0
    %v567 = vunpack.c.l.b16 %v555
    %v568 = vunpack.c.l.b16 %v556
    %v569 = vunpack.c.l.b16 %v557
    %v570 = vunpack.c.l.b16 %v558
    %v571 = vpack.c.b16 %v568, %v567
    %v572 = vpack.c.b16 %v570, %v569
    %v576 = vsel %vm142, %v554, 0
    %578 = vmatpush.bf16.msra.mxu0 0
    %579 = vmatpush.bf16.msra.mxu0 0
    %580 = vmatpush.bf16.msra.mxu0 0
    %581 = vmatpush.bf16.msra.mxu0 0
    %582 = vmatpush.bf16.msra.mxu0 0
    %583 = vmatpush.bf16.msra.mxu0 0
    %584 = vmatpush.bf16.msra.mxu0 %v572
    %585 = vmatpush.bf16.msra.mxu0 %v571
    %586 = vmatmul.bf16.gmra.mxu0 %v576
    %v587 = vpop.f32.mrf.mxu0
    %v588 = vadd.f32 %v561, %v587
    %v589 = vpop.f32.mrf.mxu0
    %v590 = vadd.f32 %v561, %v589
    %591 = vdwg.mxu0
    %v592 = vadd.f32 %v136, %v588
    %v593 = vadd.f32 %v137, %v590
    %v594 = vld [vmem:[%s8] sm:$0x1]
    %v595 = vld [vmem:[#allocation11] sm:$0x1]
    %v596 = vsel %vm142, %v592, 0.0
    %597 = vadd.xlane.f32.xlu0 %v596
    %v598 = vpop.xlane.xlu0 %597
    %v599 = vsel %vm142, %v593, 0.0
    %600 = vadd.xlane.f32.xlu0 %v599
    %v601 = vpop.xlane.xlu0 %600
    %v602 = vmul.f32 %v598, %v155
    %v603 = vmul.f32 %v601, %v155
    %v604 = vsub.f32 %v592, %v602
    %v605 = vsub.f32 %v593, %v603
    %v606 = vmul.f32 %v604, %v604
    %v607 = vmul.f32 %v605, %v605
    %v608 = vsel %vm142, %v606, 0.0
    %609 = vadd.xlane.f32.xlu0 %v608
    %v610 = vpop.xlane.xlu0 %609
    %v611 = vsel %vm142, %v607, 0.0
    %612 = vadd.xlane.f32.xlu0 %v611
    %v613 = vpop.xlane.xlu0 %612
    %v614 = vmul.f32 %v610, %v155
    %v615 = vmul.f32 %v613, %v155
    %v616 = vadd.f32 %v614, 1e-05
    %v617 = vadd.f32 %v615, 1e-05
    %v618 = vrsqrt.pop %v616
    %v619 = vmul.f32 %v618, %v616
    %v620 = vmul.f32 %v619, %v618
    %v621 = vmul.f32 0.5, %v620
    %v622 = vsub.f32 1.5, %v621
    %v623 = vmul.f32 %v618, %v622
    %vm624 = vweird.f32 %v616
    %vm625 = vweird.f32 %v618
    %vm626 = vmor %vm624, %vm625
    %v627 = vsel %vm626, %v618, %v623
    %v628 = vrsqrt.pop %v617
    %v629 = vmul.f32 %v628, %v617
    %v630 = vmul.f32 %v629, %v628
    %v631 = vmul.f32 0.5, %v630
    %v632 = vsub.f32 1.5, %v631
    %v633 = vmul.f32 %v628, %v632
    %vm634 = vweird.f32 %v617
    %vm635 = vweird.f32 %v628
    %vm636 = vmor %vm634, %vm635
    %v637 = vsel %vm636, %v628, %v633
    %v638 = vmul.f32 %v604, %v627
    %v639 = vmul.f32 %v605, %v637
    %v641 = vperm.slane %v594, 0
    %v643 = vmul.f32 %v638, %v641
    %v644 = vmul.f32 %v639, %v641
    %v646 = vperm.slane %v595, 0
    %v648 = vadd.f32 %v643, %v646
    %v649 = vadd.f32 %v644, %v646
    %v650 = vpack.c.bf16 %v649, %v648
    %v651 = vld [vmem:[%s10] sm:$0xf]
    %v652 = vld [vmem:[%s10 + $0x4] sm:$0xf]
    %v653 = vld [vmem:[%s10 + $0x8] sm:$0xf]
    %v654 = vld [vmem:[%s10 + $0xc] sm:$0xf]
    %v655 = vld [vmem:[%s11] sm:$0x1]
    %v657 = vperm.slane %v655, 0
    %v663 = vunpack.c.l.b16 %v651
    %v664 = vunpack.c.l.b16 %v652
    %v665 = vunpack.c.l.b16 %v653
    %v666 = vunpack.c.l.b16 %v654
    %v667 = vpack.c.b16 %v664, %v663
    %v668 = vpack.c.b16 %v666, %v665
    %v672 = vsel %vm142, %v650, 0
    %674 = vmatpush.bf16.msra.mxu0 0
    %675 = vmatpush.bf16.msra.mxu0 0
    %676 = vmatpush.bf16.msra.mxu0 0
    %677 = vmatpush.bf16.msra.mxu0 0
    %678 = vmatpush.bf16.msra.mxu0 0
    %679 = vmatpush.bf16.msra.mxu0 0
    %680 = vmatpush.bf16.msra.mxu0 %v668
    %681 = vmatpush.bf16.msra.mxu0 %v667
    %682 = vmatmul.bf16.gmra.mxu0 %v672
    %v683 = vpop.f32.mrf.mxu0
    %v684 = vadd.f32 %v657, %v683
    %v685 = vpop.f32.mrf.mxu0
    %v686 = vadd.f32 %v657, %v685
    %687 = vdwg.mxu0
    %v688 = vmul.f32 %v684, 1.702
    %v689 = vmul.f32 %v686, 1.702
    %v690 = vxor.u32 %v688, 2147483648
    %v691 = vxor.u32 %v689, 2147483648
    %v692 = vmul.f32 %v690, 1.442695
    %v693 = vpow.pop %v692
    %v694 = vmul.f32 %v691, 1.442695
    %v695 = vpow.pop %v694
    %v696 = vadd.f32 %v693, 1.0
    %v697 = vadd.f32 %v695, 1.0
    %v698 = vrcp.pop %v696
    %v699 = vmul.f32 %v696, %v698
    %v700 = vsub.f32 1.0, %v699
    %v701 = vmul.f32 %v698, %v700
    %v702 = vadd.f32 %v698, %v701
    %vm703 = vweird.f32 %v696
    %vm704 = vweird.f32 %v698
    %vm705 = vmor %vm703, %vm704
    %v706 = vsel %vm705, %v698, %v702
    %v707 = vand.u32 2147483647, %v696
    %vm708 = vcmp.eq.f32.partialorder %v707, 8.507059e+37
    %v709 = vand.u32 %v696, 2147483648
    %v710 = vor.u32 1.1754944e-38, %v709
    %v711 = vsel %vm708, %v710, %v706
    %v712 = vmul.f32 1.0, %v711
    %v713 = vrcp.pop %v697
    %v714 = vmul.f32 %v697, %v713
    %v715 = vsub.f32 1.0, %v714
    %v716 = vmul.f32 %v713, %v715
    %v717 = vadd.f32 %v713, %v716
    %vm718 = vweird.f32 %v697
    %vm719 = vweird.f32 %v713
    %vm720 = vmor %vm718, %vm719
    %v721 = vsel %vm720, %v713, %v717
    %v722 = vand.u32 2147483647, %v697
    %vm723 = vcmp.eq.f32.partialorder %v722, 8.507059e+37
    %v724 = vand.u32 %v697, 2147483648
    %v725 = vor.u32 1.1754944e-38, %v724
    %v726 = vsel %vm723, %v725, %v721
    %v727 = vmul.f32 1.0, %v726
    %v728 = vmul.f32 %v684, %v712
    %v729 = vmul.f32 %v686, %v727
    %v730 = vpack.c.bf16 %v729, %v728
    %v731 = vld [vmem:[%s12] sm:$0xf]
    %v732 = vld [vmem:[%s12 + $0x4] sm:$0xf]
    %v733 = vld [vmem:[%s12 + $0x8] sm:$0xf]
    %v734 = vld [vmem:[%s12 + $0xc] sm:$0xf]
    %v735 = vld [vmem:[%s12 + $0x10] sm:$0xf]
    %v736 = vld [vmem:[%s12 + $0x14] sm:$0xf]
    %v737 = vld [vmem:[%s12 + $0x18] sm:$0xf]
    %v738 = vld [vmem:[%s12 + $0x1c] sm:$0xf]
    %v739 = vld [vmem:[%s13] sm:$0x1]
    %v741 = vperm.slane %v739, 0
    %v751 = vunpack.c.l.b16 %v731
    %v752 = vunpack.c.l.b16 %v732
    %v753 = vunpack.c.l.b16 %v733
    %v754 = vunpack.c.l.b16 %v734
    %v755 = vunpack.c.l.b16 %v735
    %v756 = vunpack.c.l.b16 %v736
    %v757 = vunpack.c.l.b16 %v737
    %v758 = vunpack.c.l.b16 %v738
    %v759 = vpack.c.b16 %v752, %v751
    %v760 = vpack.c.b16 %v754, %v753
    %v761 = vpack.c.b16 %v756, %v755
    %v762 = vpack.c.b16 %v758, %v757
    %vm767 = vcmask 523264
    %v769 = vsel %vm767, %v730, 0
    %771 = vmatpush.bf16.msra.mxu0 0
    %772 = vmatpush.bf16.msra.mxu0 0
    %773 = vmatpush.bf16.msra.mxu0 0
    %774 = vmatpush.bf16.msra.mxu0 0
    %775 = vmatpush.bf16.msra.mxu0 %v762
    %776 = vmatpush.bf16.msra.mxu0 %v761
    %777 = vmatpush.bf16.msra.mxu0 %v760
    %778 = vmatpush.bf16.msra.mxu0 %v759
    %779 = vmatmul.bf16.gmra.mxu0 %v769
    %v780 = vpop.f32.mrf.mxu0
    %v781 = vadd.f32 %v741, %v780
    %v782 = vpop.f32.mrf.mxu0
    %v783 = vadd.f32 %v741, %v782
    %784 = vdwg.mxu0
    %v785 = vadd.f32 %v592, %v781
    %v786 = vadd.f32 %v593, %v783
    %787 = vst.msk [vmem:[#allocation12] sm:$0xff] %vm142, %v785
    %788 = vst.msk [vmem:[#allocation12 + $0x8] sm:$0xff] %vm142, %v786
    %s789 = scalar_lea.vmem [#allocation8], 1
    %v790 = vld [vmem:[%s789] sm:$0x1]
    %s791 = scalar_lea.vmem [#allocation9], 1
    %v792 = vld [vmem:[%s791] sm:$0x1]
    %v793 = vsel %vm142, %v785, 0.0
    %794 = vadd.xlane.f32.xlu0 %v793
    %v795 = vpop.xlane.xlu0 %794
    %v796 = vsel %vm142, %v786, 0.0
    %797 = vadd.xlane.f32.xlu0 %v796
    %v798 = vpop.xlane.xlu0 %797
    %v799 = vmul.f32 %v795, %v155
    %v800 = vmul.f32 %v798, %v155
    %v801 = vsub.f32 %v785, %v799
    %v802 = vsub.f32 %v786, %v800
    %v803 = vmul.f32 %v801, %v801
    %v804 = vmul.f32 %v802, %v802
    %v805 = vsel %vm142, %v803, 0.0
    %806 = vadd.xlane.f32.xlu0 %v805
    %v807 = vpop.xlane.xlu0 %806
    %v808 = vsel %vm142, %v804, 0.0
    %809 = vadd.xlane.f32.xlu0 %v808
    %v810 = vpop.xlane.xlu0 %809
    %v811 = vmul.f32 %v807, %v155
    %v812 = vmul.f32 %v810, %v155
    %v813 = vadd.f32 %v811, 1e-05
    %v814 = vadd.f32 %v812, 1e-05
    %v815 = vrsqrt.pop %v813
    %v816 = vmul.f32 %v815, %v813
    %v817 = vmul.f32 %v816, %v815
    %v818 = vmul.f32 0.5, %v817
    %v819 = vsub.f32 1.5, %v818
    %v820 = vmul.f32 %v815, %v819
    %vm821 = vweird.f32 %v813
    %vm822 = vweird.f32 %v815
    %vm823 = vmor %vm821, %vm822
    %v824 = vsel %vm823, %v815, %v820
    %v825 = vrsqrt.pop %v814
    %v826 = vmul.f32 %v825, %v814
    %v827 = vmul.f32 %v826, %v825
    %v828 = vmul.f32 0.5, %v827
    %v829 = vsub.f32 1.5, %v828
    %v830 = vmul.f32 %v825, %v829
    %vm831 = vweird.f32 %v814
    %vm832 = vweird.f32 %v825
    %vm833 = vmor %vm831, %vm832
    %v834 = vsel %vm833, %v825, %v830
    %v835 = vmul.f32 %v801, %v824
    %v836 = vmul.f32 %v802, %v834
    %v838 = vperm.slane %v790, 0
    %v840 = vmul.f32 %v835, %v838
    %v841 = vmul.f32 %v836, %v838
    %v843 = vperm.slane %v792, 0
    %v845 = vadd.f32 %v840, %v843
    %v846 = vadd.f32 %v841, %v843
    %v847 = vpack.c.bf16 %v846, %v845
    %s848 = scalar_lea.vmem %s4, 16
    %v849 = vld [vmem:[%s848] sm:$0xf]
    %v850 = vld [vmem:[%s848 + $0x4] sm:$0xf]
    %v851 = vld [vmem:[%s848 + $0x8] sm:$0xf]
    %v852 = vld [vmem:[%s848 + $0xc] sm:$0xf]
    %s853 = scalar_lea.vmem %s5, 1
    %v854 = vld [vmem:[%s853] sm:$0x1]
    %v856 = vperm.slane %v854, 0
    %v862 = vunpack.c.l.b16 %v849
    %v863 = vunpack.c.l.b16 %v850
    %v864 = vunpack.c.l.b16 %v851
    %v865 = vunpack.c.l.b16 %v852
    %v866 = vpack.c.b16 %v863, %v862
    %v867 = vpack.c.b16 %v865, %v864
    %v871 = vsel %vm142, %v847, 0
    %873 = vmatpush.bf16.msra.mxu0 0
    %874 = vmatpush.bf16.msra.mxu0 0
    %875 = vmatpush.bf16.msra.mxu0 0
    %876 = vmatpush.bf16.msra.mxu0 0
    %877 = vmatpush.bf16.msra.mxu0 0
    %878 = vmatpush.bf16.msra.mxu0 0
    %879 = vmatpush.bf16.msra.mxu0 %v867
    %880 = vmatpush.bf16.msra.mxu0 %v866
    %881 = vmatmul.bf16.gmra.mxu0 %v871
    %v882 = vpop.f32.mrf.mxu0
    %v883 = vadd.f32 %v856, %v882
    %v884 = vpop.f32.mrf.mxu0
    %v885 = vadd.f32 %v856, %v884
    %886 = vdwg.mxu0
    %v887 = vpack.c.bf16 %v883, %v883
    %v888 = vpack.c.bf16 %v885, %v885
    %v891 = vunpack.c.l.b16 %v887
    %v892 = vunpack.c.l.b16 %v888
    %v893 = vpack.c.b16 %v892, %v891
    %894 = vrot.lane.b32.xlu0 %v893, 96
    %v895 = vpop.permute.xlu0 %894
    %v897 = vsel %vm251, %v893, 0
    %v900 = vsel %vm251, %v895, 0
    %902 = vmatpush.bf16.xpose.msra.mxu0 0
    %903 = vmatpush.bf16.xpose.msra.mxu0 0
    %904 = vmatpush.bf16.xpose.msra.mxu0 0
    %905 = vmatpush.bf16.xpose.msra.mxu0 0
    %906 = vmatpush.bf16.xpose.msra.mxu0 0
    %907 = vmatpush.bf16.xpose.msra.mxu0 0
    %908 = vmatpush.bf16.xpose.msra.mxu0 0
    %909 = vmatpush.bf16.xpose.msra.mxu0 %v900
    %910 = vmatmul.bf16.gmra.mxu0 %v897
    %v911 = vpop.f32.mrf.mxu0
    %v912 = vadd.f32 %v138, %v911
    %v913 = vpop.f32.mrf.mxu0
    %v914 = vadd.f32 %v139, %v913
    %915 = vdwg.mxu0
    %v916 = vsel %vm272, %v912, -inf
    %917 = vmax.xlane.f32.xlu0 %v916
    %v918 = vpop.xlane.xlu0 %917
    %v919 = vsel %vm272, %v914, -inf
    %920 = vmax.xlane.f32.xlu0 %v919
    %v921 = vpop.xlane.xlu0 %920
    %v922 = vsub.f32 %v912, %v918
    %v923 = vsub.f32 %v914, %v921
    %v924 = vmul.f32 %v922, 1.442695
    %v925 = vpow.pop %v924
    %v926 = vmul.f32 %v923, 1.442695
    %v927 = vpow.pop %v926
    %v928 = vsel %vm272, %v925, 0.0
    %929 = vadd.xlane.f32.xlu0 %v928
    %v930 = vpop.xlane.xlu0 %929
    %v931 = vsel %vm272, %v927, 0.0
    %932 = vadd.xlane.f32.xlu0 %v931
    %v933 = vpop.xlane.xlu0 %932
    %v934 = vrcp.pop %v930
    %v935 = vrcp.pop %v933
    %v936 = vmul.f32 %v925, %v934
    %v937 = vmul.f32 %v927, %v935
    %v938 = vpack.c.bf16 %v937, %v936
    %939 = vrot.lane.b32.xlu0 %v893, 64
    %v940 = vpop.permute.xlu0 %939
    %v943 = vsel %vm272, %v938, 0
    %945 = vmatpush.bf16.msra.mxu0 0
    %946 = vmatpush.bf16.msra.mxu0 0
    %947 = vmatpush.bf16.msra.mxu0 0
    %948 = vmatpush.bf16.msra.mxu0 0
    %949 = vmatpush.bf16.msra.mxu0 0
    %950 = vmatpush.bf16.msra.mxu0 0
    %951 = vmatpush.bf16.msra.mxu0 0
    %952 = vmatpush.bf16.msra.mxu0 %v940
    %953 = vmatmul.bf16.gmra.mxu0 %v943
    %v954 = vpop.f32.mrf.mxu0
    %v955 = vadd.f32 0.0, %v954
    %v956 = vpop.f32.mrf.mxu0
    %v957 = vadd.f32 0.0, %v956
    %958 = vdwg.mxu0
    %959 = vst.msk [vmem:[#allocation2] sm:$0xff] %vm251, %v955
    %960 = vst.msk [vmem:[#allocation2 + $0x8] sm:$0xff] %vm251, %v957
    %961 = vrot.lane.b32.xlu0 %v893, 120
    %v962 = vpop.permute.xlu0 %961
    %963 = vrot.lane.b32.xlu0 %v893, 88
    %v964 = vpop.permute.xlu0 %963
    %v966 = vsel %vm251, %v962, 0
    %v969 = vsel %vm251, %v964, 0
    %971 = vmatpush.bf16.xpose.msra.mxu0 0
    %972 = vmatpush.bf16.xpose.msra.mxu0 0
    %973 = vmatpush.bf16.xpose.msra.mxu0 0
    %974 = vmatpush.bf16.xpose.msra.mxu0 0
    %975 = vmatpush.bf16.xpose.msra.mxu0 0
    %976 = vmatpush.bf16.xpose.msra.mxu0 0
    %977 = vmatpush.bf16.xpose.msra.mxu0 0
    %978 = vmatpush.bf16.xpose.msra.mxu0 %v969
    %979 = vmatmul.bf16.gmra.mxu0 %v966
    %v980 = vpop.f32.mrf.mxu0
    %v981 = vadd.f32 %v138, %v980
    %v982 = vpop.f32.mrf.mxu0
    %v983 = vadd.f32 %v139, %v982
    %984 = vdwg.mxu0
    %v985 = vsel %vm272, %v981, -inf
    %986 = vmax.xlane.f32.xlu0 %v985
    %v987 = vpop.xlane.xlu0 %986
    %v988 = vsel %vm272, %v983, -inf
    %989 = vmax.xlane.f32.xlu0 %v988
    %v990 = vpop.xlane.xlu0 %989
    %v991 = vsub.f32 %v981, %v987
    %v992 = vsub.f32 %v983, %v990
    %v993 = vmul.f32 %v991, 1.442695
    %v994 = vpow.pop %v993
    %v995 = vmul.f32 %v992, 1.442695
    %v996 = vpow.pop %v995
    %v997 = vsel %vm272, %v994, 0.0
    %998 = vadd.xlane.f32.xlu0 %v997
    %v999 = vpop.xlane.xlu0 %998
    %v1000 = vsel %vm272, %v996, 0.0
    %1001 = vadd.xlane.f32.xlu0 %v1000
    %v1002 = vpop.xlane.xlu0 %1001
    %v1003 = vrcp.pop %v999
    %v1004 = vrcp.pop %v1002
    %v1005 = vmul.f32 %v994, %v1003
    %v1006 = vmul.f32 %v996, %v1004
    %v1007 = vpack.c.bf16 %v1006, %v1005
    %1008 = vrot.lane.b32.xlu0 %v893, 56
    %v1009 = vpop.permute.xlu0 %1008
    %v1012 = vsel %vm272, %v1007, 0
    %1014 = vmatpush.bf16.msra.mxu0 0
    %1015 = vmatpush.bf16.msra.mxu0 0
    %1016 = vmatpush.bf16.msra.mxu0 0
    %1017 = vmatpush.bf16.msra.mxu0 0
    %1018 = vmatpush.bf16.msra.mxu0 0
    %1019 = vmatpush.bf16.msra.mxu0 0
    %1020 = vmatpush.bf16.msra.mxu0 0
    %1021 = vmatpush.bf16.msra.mxu0 %v1009
    %1022 = vmatmul.bf16.gmra.mxu0 %v1012
    %v1023 = vpop.f32.mrf.mxu0
    %v1024 = vadd.f32 0.0, %v1023
    %v1025 = vpop.f32.mrf.mxu0
    %v1026 = vadd.f32 0.0, %v1025
    %1027 = vdwg.mxu0
    %1030 = vrot.lane.b32.xlu0 %v1024, 8
    %v1031 = vpop.permute.xlu0 %1030
    %1032 = vrot.lane.b32.xlu0 %v1026, 8
    %v1033 = vpop.permute.xlu0 %1032
    %1036 = vst.msk [vmem:[#allocation2] sm:$0xff] %vm393, %v1031
    %1037 = vst.msk [vmem:[#allocation2 + $0x8] sm:$0xff] %vm393, %v1033
    %1038 = vrot.lane.b32.xlu0 %v893, 112
    %v1039 = vpop.permute.xlu0 %1038
    %1040 = vrot.lane.b32.xlu0 %v893, 80
    %v1041 = vpop.permute.xlu0 %1040
    %v1043 = vsel %vm251, %v1039, 0
    %v1046 = vsel %vm251, %v1041, 0
    %1048 = vmatpush.bf16.xpose.msra.mxu0 0
    %1049 = vmatpush.bf16.xpose.msra.mxu0 0
    %1050 = vmatpush.bf16.xpose.msra.mxu0 0
    %1051 = vmatpush.bf16.xpose.msra.mxu0 0
    %1052 = vmatpush.bf16.xpose.msra.mxu0 0
    %1053 = vmatpush.bf16.xpose.msra.mxu0 0
    %1054 = vmatpush.bf16.xpose.msra.mxu0 0
    %1055 = vmatpush.bf16.xpose.msra.mxu0 %v1046
    %1056 = vmatmul.bf16.gmra.mxu0 %v1043
    %v1057 = vpop.f32.mrf.mxu0
    %v1058 = vadd.f32 %v138, %v1057
    %v1059 = vpop.f32.mrf.mxu0
    %v1060 = vadd.f32 %v139, %v1059
    %1061 = vdwg.mxu0
    %v1062 = vsel %vm272, %v1058, -inf
    %1063 = vmax.xlane.f32.xlu0 %v1062
    %v1064 = vpop.xlane.xlu0 %1063
    %v1065 = vsel %vm272, %v1060, -inf
    %1066 = vmax.xlane.f32.xlu0 %v1065
    %v1067 = vpop.xlane.xlu0 %1066
    %v1068 = vsub.f32 %v1058, %v1064
    %v1069 = vsub.f32 %v1060, %v1067
    %v1070 = vmul.f32 %v1068, 1.442695
    %v1071 = vpow.pop %v1070
    %v1072 = vmul.f32 %v1069, 1.442695
    %v1073 = vpow.pop %v1072
    %v1074 = vsel %vm272, %v1071, 0.0
    %1075 = vadd.xlane.f32.xlu0 %v1074
    %v1076 = vpop.xlane.xlu0 %1075
    %v1077 = vsel %vm272, %v1073, 0.0
    %1078 = vadd.xlane.f32.xlu0 %v1077
    %v1079 = vpop.xlane.xlu0 %1078
    %v1080 = vrcp.pop %v1076
    %v1081 = vrcp.pop %v1079
    %v1082 = vmul.f32 %v1071, %v1080
    %v1083 = vmul.f32 %v1073, %v1081
    %v1084 = vpack.c.bf16 %v1083, %v1082
    %1085 = vrot.lane.b32.xlu0 %v893, 48
    %v1086 = vpop.permute.xlu0 %1085
    %v1089 = vsel %vm272, %v1084, 0
    %1091 = vmatpush.bf16.msra.mxu0 0
    %1092 = vmatpush.bf16.msra.mxu0 0
    %1093 = vmatpush.bf16.msra.mxu0 0
    %1094 = vmatpush.bf16.msra.mxu0 0
    %1095 = vmatpush.bf16.msra.mxu0 0
    %1096 = vmatpush.bf16.msra.mxu0 0
    %1097 = vmatpush.bf16.msra.mxu0 0
    %1098 = vmatpush.bf16.msra.mxu0 %v1086
    %1099 = vmatmul.bf16.gmra.mxu0 %v1089
    %v1100 = vpop.f32.mrf.mxu0
    %v1101 = vadd.f32 0.0, %v1100
    %v1102 = vpop.f32.mrf.mxu0
    %v1103 = vadd.f32 0.0, %v1102
    %1104 = vdwg.mxu0
    %1107 = vrot.lane.b32.xlu0 %v1101, 16
    %v1108 = vpop.permute.xlu0 %1107
    %1109 = vrot.lane.b32.xlu0 %v1103, 16
    %v1110 = vpop.permute.xlu0 %1109
    %1113 = vst.msk [vmem:[#allocation2] sm:$0xff] %vm471, %v1108
    %1114 = vst.msk [vmem:[#allocation2 + $0x8] sm:$0xff] %vm471, %v1110
    %1115 = vrot.lane.b32.xlu0 %v893, 104
    %v1116 = vpop.permute.xlu0 %1115
    %1117 = vrot.lane.b32.xlu0 %v893, 72
    %v1118 = vpop.permute.xlu0 %1117
    %v1120 = vsel %vm251, %v1116, 0
    %v1123 = vsel %vm251, %v1118, 0
    %1125 = vmatpush.bf16.xpose.msra.mxu0 0
    %1126 = vmatpush.bf16.xpose.msra.mxu0 0
    %1127 = vmatpush.bf16.xpose.msra.mxu0 0
    %1128 = vmatpush.bf16.xpose.msra.mxu0 0
    %1129 = vmatpush.bf16.xpose.msra.mxu0 0
    %1130 = vmatpush.bf16.xpose.msra.mxu0 0
    %1131 = vmatpush.bf16.xpose.msra.mxu0 0
    %1132 = vmatpush.bf16.xpose.msra.mxu0 %v1123
    %1133 = vmatmul.bf16.gmra.mxu0 %v1120
    %v1134 = vpop.f32.mrf.mxu0
    %v1135 = vadd.f32 %v138, %v1134
    %v1136 = vpop.f32.mrf.mxu0
    %v1137 = vadd.f32 %v139, %v1136
    %1138 = vdwg.mxu0
    %v1139 = vsel %vm272, %v1135, -inf
    %1140 = vmax.xlane.f32.xlu0 %v1139
    %v1141 = vpop.xlane.xlu0 %1140
    %v1142 = vsel %vm272, %v1137, -inf
    %1143 = vmax.xlane.f32.xlu0 %v1142
    %v1144 = vpop.xlane.xlu0 %1143
    %v1145 = vsub.f32 %v1135, %v1141
    %v1146 = vsub.f32 %v1137, %v1144
    %v1147 = vmul.f32 %v1145, 1.442695
    %v1148 = vpow.pop %v1147
    %v1149 = vmul.f32 %v1146, 1.442695
    %v1150 = vpow.pop %v1149
    %v1151 = vsel %vm272, %v1148, 0.0
    %1152 = vadd.xlane.f32.xlu0 %v1151
    %v1153 = vpop.xlane.xlu0 %1152
    %v1154 = vsel %vm272, %v1150, 0.0
    %1155 = vadd.xlane.f32.xlu0 %v1154
    %v1156 = vpop.xlane.xlu0 %1155
    %v1157 = vrcp.pop %v1153
    %v1158 = vrcp.pop %v1156
    %v1159 = vmul.f32 %v1148, %v1157
    %v1160 = vmul.f32 %v1150, %v1158
    %v1161 = vpack.c.bf16 %v1160, %v1159
    %1162 = vrot.lane.b32.xlu0 %v893, 40
    %v1163 = vpop.permute.xlu0 %1162
    %v1166 = vsel %vm272, %v1161, 0
    %1168 = vmatpush.bf16.msra.mxu0 0
    %1169 = vmatpush.bf16.msra.mxu0 0
    %1170 = vmatpush.bf16.msra.mxu0 0
    %1171 = vmatpush.bf16.msra.mxu0 0
    %1172 = vmatpush.bf16.msra.mxu0 0
    %1173 = vmatpush.bf16.msra.mxu0 0
    %1174 = vmatpush.bf16.msra.mxu0 0
    %1175 = vmatpush.bf16.msra.mxu0 %v1163
    %1176 = vmatmul.bf16.gmra.mxu0 %v1166
    %v1177 = vpop.f32.mrf.mxu0
    %v1178 = vadd.f32 0.0, %v1177
    %v1179 = vpop.f32.mrf.mxu0
    %v1180 = vadd.f32 0.0, %v1179
    %1181 = vdwg.mxu0
    %1184 = vrot.lane.b32.xlu0 %v1178, 24
    %v1185 = vpop.permute.xlu0 %1184
    %1186 = vrot.lane.b32.xlu0 %v1180, 24
    %v1187 = vpop.permute.xlu0 %1186
    %1190 = vst.msk [vmem:[#allocation2] sm:$0xff] %vm549, %v1185
    %1191 = vst.msk [vmem:[#allocation2 + $0x8] sm:$0xff] %vm549, %v1187
    %v1192 = vld [vmem:[#allocation2] sm:$0xff]
    %v1193 = vld [vmem:[#allocation2 + $0x8] sm:$0xff]
    %v1194 = vpack.c.bf16 %v1193, %v1192
    %s1195 = scalar_lea.vmem %s6, 16
    %v1196 = vld [vmem:[%s1195] sm:$0xf]
    %v1197 = vld [vmem:[%s1195 + $0x4] sm:$0xf]
    %v1198 = vld [vmem:[%s1195 + $0x8] sm:$0xf]
    %v1199 = vld [vmem:[%s1195 + $0xc] sm:$0xf]
    %s1200 = scalar_lea.vmem %s7, 1
    %v1201 = vld [vmem:[%s1200] sm:$0x1]
    %v1203 = vperm.slane %v1201, 0
    %v1209 = vunpack.c.l.b16 %v1196
    %v1210 = vunpack.c.l.b16 %v1197
    %v1211 = vunpack.c.l.b16 %v1198
    %v1212 = vunpack.c.l.b16 %v1199
    %v1213 = vpack.c.b16 %v1210, %v1209
    %v1214 = vpack.c.b16 %v1212, %v1211
    %v1218 = vsel %vm142, %v1194, 0
    %1220 = vmatpush.bf16.msra.mxu0 0
    %1221 = vmatpush.bf16.msra.mxu0 0
    %1222 = vmatpush.bf16.msra.mxu0 0
    %1223 = vmatpush.bf16.msra.mxu0 0
    %1224 = vmatpush.bf16.msra.mxu0 0
    %1225 = vmatpush.bf16.msra.mxu0 0
    %1226 = vmatpush.bf16.msra.mxu0 %v1214
    %1227 = vmatpush.bf16.msra.mxu0 %v1213
    %1228 = vmatmul.bf16.gmra.mxu0 %v1218
    %v1229 = vpop.f32.mrf.mxu0
    %v1230 = vadd.f32 %v1203, %v1229
    %v1231 = vpop.f32.mrf.mxu0
    %v1232 = vadd.f32 %v1203, %v1231
    %1233 = vdwg.mxu0
    %v1234 = vadd.f32 %v785, %v1230
    %v1235 = vadd.f32 %v786, %v1232
    %s1236 = scalar_lea.vmem %s8, 1
    %v1237 = vld [vmem:[%s1236] sm:$0x1]
    %s1238 = scalar_lea.vmem [#allocation11], 1
    %v1239 = vld [vmem:[%s1238] sm:$0x1]
    %v1240 = vsel %vm142, %v1234, 0.0
    %1241 = vadd.xlane.f32.xlu0 %v1240
    %v1242 = vpop.xlane.xlu0 %1241
    %v1243 = vsel %vm142, %v1235, 0.0
    %1244 = vadd.xlane.f32.xlu0 %v1243
    %v1245 = vpop.xlane.xlu0 %1244
    %v1246 = vmul.f32 %v1242, %v155
    %v1247 = vmul.f32 %v1245, %v155
    %v1248 = vsub.f32 %v1234, %v1246
    %v1249 = vsub.f32 %v1235, %v1247
    %v1250 = vmul.f32 %v1248, %v1248
    %v1251 = vmul.f32 %v1249, %v1249
    %v1252 = vsel %vm142, %v1250, 0.0
    %1253 = vadd.xlane.f32.xlu0 %v1252
    %v1254 = vpop.xlane.xlu0 %1253
    %v1255 = vsel %vm142, %v1251, 0.0
    %1256 = vadd.xlane.f32.xlu0 %v1255
    %v1257 = vpop.xlane.xlu0 %1256
    %v1258 = vmul.f32 %v1254, %v155
    %v1259 = vmul.f32 %v1257, %v155
    %v1260 = vadd.f32 %v1258, 1e-05
    %v1261 = vadd.f32 %v1259, 1e-05
    %v1262 = vrsqrt.pop %v1260
    %v1263 = vmul.f32 %v1262, %v1260
    %v1264 = vmul.f32 %v1263, %v1262
    %v1265 = vmul.f32 0.5, %v1264
    %v1266 = vsub.f32 1.5, %v1265
    %v1267 = vmul.f32 %v1262, %v1266
    %vm1268 = vweird.f32 %v1260
    %vm1269 = vweird.f32 %v1262
    %vm1270 = vmor %vm1268, %vm1269
    %v1271 = vsel %vm1270, %v1262, %v1267
    %v1272 = vrsqrt.pop %v1261
    %v1273 = vmul.f32 %v1272, %v1261
    %v1274 = vmul.f32 %v1273, %v1272
    %v1275 = vmul.f32 0.5, %v1274
    %v1276 = vsub.f32 1.5, %v1275
    %v1277 = vmul.f32 %v1272, %v1276
    %vm1278 = vweird.f32 %v1261
    %vm1279 = vweird.f32 %v1272
    %vm1280 = vmor %vm1278, %vm1279
    %v1281 = vsel %vm1280, %v1272, %v1277
    %v1282 = vmul.f32 %v1248, %v1271
    %v1283 = vmul.f32 %v1249, %v1281
    %v1285 = vperm.slane %v1237, 0
    %v1287 = vmul.f32 %v1282, %v1285
    %v1288 = vmul.f32 %v1283, %v1285
    %v1290 = vperm.slane %v1239, 0
    %v1292 = vadd.f32 %v1287, %v1290
    %v1293 = vadd.f32 %v1288, %v1290
    %v1294 = vpack.c.bf16 %v1293, %v1292
    %s1295 = scalar_lea.vmem %s10, 16
    %v1296 = vld [vmem:[%s1295] sm:$0xf]
    %v1297 = vld [vmem:[%s1295 + $0x4] sm:$0xf]
    %v1298 = vld [vmem:[%s1295 + $0x8] sm:$0xf]
    %v1299 = vld [vmem:[%s1295 + $0xc] sm:$0xf]
    %s1300 = scalar_lea.vmem %s11, 1
    %v1301 = vld [vmem:[%s1300] sm:$0x1]
    %v1303 = vperm.slane %v1301, 0
    %v1309 = vunpack.c.l.b16 %v1296
    %v1310 = vunpack.c.l.b16 %v1297
    %v1311 = vunpack.c.l.b16 %v1298
    %v1312 = vunpack.c.l.b16 %v1299
    %v1313 = vpack.c.b16 %v1310, %v1309
    %v1314 = vpack.c.b16 %v1312, %v1311
    %v1318 = vsel %vm142, %v1294, 0
    %1320 = vmatpush.bf16.msra.mxu0 0
    %1321 = vmatpush.bf16.msra.mxu0 0
    %1322 = vmatpush.bf16.msra.mxu0 0
    %1323 = vmatpush.bf16.msra.mxu0 0
    %1324 = vmatpush.bf16.msra.mxu0 0
    %1325 = vmatpush.bf16.msra.mxu0 0
    %1326 = vmatpush.bf16.msra.mxu0 %v1314
    %1327 = vmatpush.bf16.msra.mxu0 %v1313
    %1328 = vmatmul.bf16.gmra.mxu0 %v1318
    %v1329 = vpop.f32.mrf.mxu0
    %v1330 = vadd.f32 %v1303, %v1329
    %v1331 = vpop.f32.mrf.mxu0
    %v1332 = vadd.f32 %v1303, %v1331
    %1333 = vdwg.mxu0
    %v1334 = vmul.f32 %v1330, 1.702
    %v1335 = vmul.f32 %v1332, 1.702
    %v1336 = vxor.u32 %v1334, 2147483648
    %v1337 = vxor.u32 %v1335, 2147483648
    %v1338 = vmul.f32 %v1336, 1.442695
    %v1339 = vpow.pop %v1338
    %v1340 = vmul.f32 %v1337, 1.442695
    %v1341 = vpow.pop %v1340
    %v1342 = vadd.f32 %v1339, 1.0
    %v1343 = vadd.f32 %v1341, 1.0
    %v1344 = vrcp.pop %v1342
    %v1345 = vmul.f32 %v1342, %v1344
    %v1346 = vsub.f32 1.0, %v1345
    %v1347 = vmul.f32 %v1344, %v1346
    %v1348 = vadd.f32 %v1344, %v1347
    %vm1349 = vweird.f32 %v1342
    %vm1350 = vweird.f32 %v1344
    %vm1351 = vmor %vm1349, %vm1350
    %v1352 = vsel %vm1351, %v1344, %v1348
    %v1353 = vand.u32 2147483647, %v1342
    %vm1354 = vcmp.eq.f32.partialorder %v1353, 8.507059e+37
    %v1355 = vand.u32 %v1342, 2147483648
    %v1356 = vor.u32 1.1754944e-38, %v1355
    %v1357 = vsel %vm1354, %v1356, %v1352
    %v1358 = vmul.f32 1.0, %v1357
    %v1359 = vrcp.pop %v1343
    %v1360 = vmul.f32 %v1343, %v1359
    %v1361 = vsub.f32 1.0, %v1360
    %v1362 = vmul.f32 %v1359, %v1361
    %v1363 = vadd.f32 %v1359, %v1362
    %vm1364 = vweird.f32 %v1343
    %vm1365 = vweird.f32 %v1359
    %vm1366 = vmor %vm1364, %vm1365
    %v1367 = vsel %vm1366, %v1359, %v1363
    %v1368 = vand.u32 2147483647, %v1343
    %vm1369 = vcmp.eq.f32.partialorder %v1368, 8.507059e+37
    %v1370 = vand.u32 %v1343, 2147483648
    %v1371 = vor.u32 1.1754944e-38, %v1370
    %v1372 = vsel %vm1369, %v1371, %v1367
    %v1373 = vmul.f32 1.0, %v1372
    %v1374 = vmul.f32 %v1330, %v1358
    %v1375 = vmul.f32 %v1332, %v1373
    %v1376 = vpack.c.bf16 %v1375, %v1374
    %s1377 = scalar_lea.vmem %s12, 32
    %v1378 = vld [vmem:[%s1377] sm:$0xf]
    %v1379 = vld [vmem:[%s1377 + $0x4] sm:$0xf]
    %v1380 = vld [vmem:[%s1377 + $0x8] sm:$0xf]
    %v1381 = vld [vmem:[%s1377 + $0xc] sm:$0xf]
    %v1382 = vld [vmem:[%s1377 + $0x10] sm:$0xf]
    %v1383 = vld [vmem:[%s1377 + $0x14] sm:$0xf]
    %v1384 = vld [vmem:[%s1377 + $0x18] sm:$0xf]
    %v1385 = vld [vmem:[%s1377 + $0x1c] sm:$0xf]
    %s1386 = scalar_lea.vmem %s13, 1
    %v1387 = vld [vmem:[%s1386] sm:$0x1]
    %v1389 = vperm.slane %v1387, 0
    %v1399 = vunpack.c.l.b16 %v1378
    %v1400 = vunpack.c.l.b16 %v1379
    %v1401 = vunpack.c.l.b16 %v1380
    %v1402 = vunpack.c.l.b16 %v1381
    %v1403 = vunpack.c.l.b16 %v1382
    %v1404 = vunpack.c.l.b16 %v1383
    %v1405 = vunpack.c.l.b16 %v1384
    %v1406 = vunpack.c.l.b16 %v1385
    %v1407 = vpack.c.b16 %v1400, %v1399
    %v1408 = vpack.c.b16 %v1402, %v1401
    %v1409 = vpack.c.b16 %v1404, %v1403
    %v1410 = vpack.c.b16 %v1406, %v1405
    %v1416 = vsel %vm767, %v1376, 0
    %1418 = vmatpush.bf16.msra.mxu0 0
    %1419 = vmatpush.bf16.msra.mxu0 0
    %1420 = vmatpush.bf16.msra.mxu0 0
    %1421 = vmatpush.bf16.msra.mxu0 0
    %1422 = vmatpush.bf16.msra.mxu0 %v1410
    %1423 = vmatpush.bf16.msra.mxu0 %v1409
    %1424 = vmatpush.bf16.msra.mxu0 %v1408
    %1425 = vmatpush.bf16.msra.mxu0 %v1407
    %1426 = vmatmul.bf16.gmra.mxu0 %v1416
    %v1427 = vpop.f32.mrf.mxu0
    %v1428 = vadd.f32 %v1389, %v1427
    %v1429 = vpop.f32.mrf.mxu0
    %v1430 = vadd.f32 %v1389, %v1429
    %1431 = vdwg.mxu0
    %v1432 = vadd.f32 %v1234, %v1428
    %v1433 = vadd.f32 %v1235, %v1430
    %s1434 = scalar_lea.vmem [#allocation12], 16
    %1435 = vst.msk [vmem:[%s1434] sm:$0xff] %vm142, %v1432
    %1436 = vst.msk [vmem:[%s1434 + $0x8] sm:$0xff] %vm142, %v1433
    %v1437 = vld [vmem:[%s14] sm:$0x1]
    %v1438 = vld [vmem:[%s15] sm:$0x1]
    %v1439 = vsel %vm142, %v1432, 0.0
    %1440 = vadd.xlane.f32.xlu0 %v1439
    %v1441 = vpop.xlane.xlu0 %1440
    %v1442 = vsel %vm142, %v1433, 0.0
    %1443 = vadd.xlane.f32.xlu0 %v1442
    %v1444 = vpop.xlane.xlu0 %1443
    %v1445 = vmul.f32 %v1441, %v155
    %v1446 = vmul.f32 %v1444, %v155
    %v1447 = vsub.f32 %v1432, %v1445
    %v1448 = vsub.f32 %v1433, %v1446
    %v1449 = vmul.f32 %v1447, %v1447
    %v1450 = vmul.f32 %v1448, %v1448
    %v1451 = vsel %vm142, %v1449, 0.0
    %1452 = vadd.xlane.f32.xlu0 %v1451
    %v1453 = vpop.xlane.xlu0 %1452
    %v1454 = vsel %vm142, %v1450, 0.0
    %1455 = vadd.xlane.f32.xlu0 %v1454
    %v1456 = vpop.xlane.xlu0 %1455
    %v1457 = vmul.f32 %v1453, %v155
    %v1458 = vmul.f32 %v1456, %v155
    %v1459 = vadd.f32 %v1457, 1e-05
    %v1460 = vadd.f32 %v1458, 1e-05
    %v1461 = vrsqrt.pop %v1459
    %v1462 = vmul.f32 %v1461, %v1459
    %v1463 = vmul.f32 %v1462, %v1461
    %v1464 = vmul.f32 0.5, %v1463
    %v1465 = vsub.f32 1.5, %v1464
    %v1466 = vmul.f32 %v1461, %v1465
    %vm1467 = vweird.f32 %v1459
    %vm1468 = vweird.f32 %v1461
    %vm1469 = vmor %vm1467, %vm1468
    %v1470 = vsel %vm1469, %v1461, %v1466
    %v1471 = vrsqrt.pop %v1460
    %v1472 = vmul.f32 %v1471, %v1460
    %v1473 = vmul.f32 %v1472, %v1471
    %v1474 = vmul.f32 0.5, %v1473
    %v1475 = vsub.f32 1.5, %v1474
    %v1476 = vmul.f32 %v1471, %v1475
    %vm1477 = vweird.f32 %v1460
    %vm1478 = vweird.f32 %v1471
    %vm1479 = vmor %vm1477, %vm1478
    %v1480 = vsel %vm1479, %v1471, %v1476
    %v1481 = vmul.f32 %v1447, %v1470
    %v1482 = vmul.f32 %v1448, %v1480
    %v1484 = vperm.slane %v1437, 0
    %v1486 = vmul.f32 %v1481, %v1484
    %v1487 = vmul.f32 %v1482, %v1484
    %v1489 = vperm.slane %v1438, 0
    %v1491 = vadd.f32 %v1486, %v1489
    %v1492 = vadd.f32 %v1487, %v1489
    %1493 = vst.msk [vmem:[#allocation13] sm:$0xff] %vm142, %v1491
    %1494 = vst.msk [vmem:[#allocation13 + $0x8] sm:$0xff] %vm142, %v1492
    // Predicated region
    $region86: #{tpu_custom_call.1} parent=1 // pred_check
      _
    $region87: #{tpu_custom_call.1} parent=1 // pred_check_branch
      %1496 = sbr.rel (0) target = $region89
    $region88: #{tpu_custom_call.1} parent=1 // pred_region
      %1498 = vsyncadd [#allocation5], 0
      %s1499 = sshll.u32 [#allocation12], 4
      %s1500 = int_to_ptr.vmem [resolvable:$true] %s1499
      %s1501 = sshll.u32 %s16, 4
      %s1502 = int_to_ptr.hbm [resolvable:$true] %s1501
      %1507 = dma.vmem_to_hbm [thread:$0]  %s1500, 512, %s1502, [#allocation5], 128, 128, 8
    $region89: #{tpu_custom_call.1} parent=1 // pred_fallthru
      _
    // Predicated region
    $region90: #{tpu_custom_call.1} parent=1 // pred_check
      _
    $region91: #{tpu_custom_call.1} parent=1 // pred_check_branch
      %1509 = sbr.rel (0) target = $region93
    $region92: #{tpu_custom_call.1} parent=1 // pred_region
      %1511 = vsyncadd [#allocation14], 0
      %s1512 = sshll.u32 [#allocation13], 4
      %s1513 = int_to_ptr.vmem [resolvable:$true] %s1512
      %s1514 = sshll.u32 %s17, 4
      %s1515 = int_to_ptr.hbm [resolvable:$true] %s1514
      %1520 = dma.vmem_to_hbm [thread:$0]  %s1513, 256, %s1515, [#allocation14], 128, 128, 8
    $region93: #{tpu_custom_call.1} parent=1 // pred_fallthru
      _
    // Predicated region
    $region94: #{tpu_custom_call.1} parent=1 // pred_check
      _
    $region95: #{tpu_custom_call.1} parent=1 // pred_check_branch
      %1522 = sbr.rel (0) target = $region97
    $region96: #{tpu_custom_call.1} parent=1 // pred_region
      %1524 = dma.done [#allocation5], 512
    $region97: #{tpu_custom_call.1} parent=1 // pred_fallthru
      _
    // Predicated region
    $region98: #{tpu_custom_call.1} parent=1 // pred_check
      _
    $region99: #{tpu_custom_call.1} parent=1 // pred_check_branch
      %1526 = sbr.rel (0) target = $region101
    $region100: #{tpu_custom_call.1} parent=1 // pred_region
      %1528 = dma.done [#allocation14], 256
    $region101: #{tpu_custom_call.1} parent=1 // pred_fallthru
      _
    %1529 = vsyncpa [#allocation4], 1
    %1530 = vsyncpa [#allocation7], 1
    %1531 = vsyncpa [#allocation10], 1
    %1532 = vsyncpa [#allocation5], 1
    %1533 = vsyncpa [#allocation14], 1

</llo_original>
